<compile_context>
chip_gen: v5e
topology: v5e:2x2
jax: 0.10.0
libtpu: 0.0.40
codegen_flags: <defaults>
</compile_context>

<pallas_src>
from functools import partial

import jax
import jax.numpy as jnp
from jax.experimental import pallas as pl
from jax.experimental.pallas import tpu as pltpu

IN_FEATURES = 512
LANE = 128


def _round_up(x, m):
    return (x + m - 1) // m * m


def _default_bf16_epilogue():
    # bf16-native VPU epilogue on v6e/v7x; keep f32 elsewhere (v5e has no bf16 VALU).
    try:
        kind = jax.devices()[0].device_kind.lower()
    except Exception:
        return False
    return ("v6" in kind) or ("v7" in kind)


def _epilogue(h_f32, b_ref):
    """bias-add + LeakyReLU(0.2) (maximum form), returns bf16 for the next matmul.

    Epilogue dtype is inferred from the bias dtype chosen at prepare_params time.
    """
    if b_ref.dtype == jnp.bfloat16:
        t = h_f32.astype(jnp.bfloat16) + b_ref[...]
    else:
        t = h_f32 + b_ref[...]
    t = jnp.maximum(t, 0.2 * t)          # == LeakyReLU(0.2) for 0 < slope < 1
    return t.astype(jnp.bfloat16)


def fcnn_kernel(x_ref,
                w1_ref, b1_ref,
                w2_ref, b2_ref,
                w3_ref, b3_ref,
                w4_ref, b4_ref,
                o_ref,
                *, n_sub):
    tb = x_ref.shape[0]
    rows = tb // n_sub
    # Unrolled sub-tile loop: straight-line code lets the scheduler overlap the
    # VPU epilogue of one sub-tile with the MXU matmuls of the other.
    for s in range(n_sub):
        r0 = s * rows

        # Layer 1: (rows,512)bf16 @ (512,1024)bf16 -> f32 accumulate
        x = x_ref[pl.ds(r0, rows), :].astype(jnp.bfloat16)
        h = jnp.dot(x, w1_ref[...], preferred_element_type=jnp.float32)
        h = _epilogue(h, b1_ref)
        # Dropout(0.1) -> identity (eval mode)

        # Layer 2: (rows,1024) @ (1024,256)
        h = jnp.dot(h, w2_ref[...], preferred_element_type=jnp.float32)
        h = _epilogue(h, b2_ref)

        # Layer 3: (rows,256) @ (256,256)
        h = jnp.dot(h, w3_ref[...], preferred_element_type=jnp.float32)
        h = _epilogue(h, b3_ref)

        # Layer 4 (logits, lane-padded to a multiple of 128): (rows,256) @ (256,Cpad)
        logits = jnp.dot(h, w4_ref[...], preferred_element_type=jnp.float32)
        o_ref[pl.ds(r0, rows), :] = (logits + b4_ref[...]).astype(o_ref.dtype)


def prepare_params(params, *, bf16_epilogue=None):
    """One-time param prep: bf16 weights, lane-padded final layer, bias dtypes.

    Call once (e.g. at init) and reuse the result for every forward -- this keeps
    the per-call wrapper free of weight casts / pads.
    """
    if bf16_epilogue is None:
        bf16_epilogue = _default_bf16_epilogue()

    (w1, b1), (w2, b2), (w3, b3), (w4, b4) = params
    num_classes = w4.shape[1]
    nc_pad = _round_up(num_classes, LANE)

    b4 = jnp.reshape(b4, (1, -1))
    if nc_pad != num_classes:
        w4 = jnp.pad(w4, ((0, 0), (0, nc_pad - num_classes)))
        b4 = jnp.pad(b4, ((0, 0), (0, nc_pad - num_classes)))

    hid_bias_dtype = jnp.bfloat16 if bf16_epilogue else jnp.float32
    return dict(
        w1=w1.astype(jnp.bfloat16), b1=jnp.reshape(b1, (1, -1)).astype(hid_bias_dtype),
        w2=w2.astype(jnp.bfloat16), b2=jnp.reshape(b2, (1, -1)).astype(hid_bias_dtype),
        w3=w3.astype(jnp.bfloat16), b3=jnp.reshape(b3, (1, -1)).astype(hid_bias_dtype),
        w4=w4.astype(jnp.bfloat16), b4=b4.astype(jnp.float32),
        num_classes=num_classes,
    )


def fcnn_forward(x, prepared, *, batch_tile=512):
    """x: (B, C, H, W) with C*H*W == 512 (or already (B, 512)); prepared = prepare_params(...)."""
    B = x.shape[0]
    x_flat = x.reshape(B, -1)  # torch: input.view(B, -1); cast to bf16 happens in-kernel
    assert x_flat.shape[1] == IN_FEATURES, "fcnn expects 512 flattened features"

    num_classes = prepared["num_classes"]
    nc_pad = prepared["w4"].shape[1]

    # Tile selection: multiples of 16 (bf16 sublane packing). For B > 32 ensure
    # at least 2 grid steps (v7x megacore), capped at batch_tile rows per step.
    if B <= 32:
        TB = _round_up(max(B, 1), 16)
    else:
        TB = min(batch_tile, _round_up((B + 1) // 2, 16))
    B_pad = _round_up(B, TB)
    if B_pad != B:
        x_flat = jnp.pad(x_flat, ((0, B_pad - B), (0, 0)))

    n_sub = 2 if TB >= 32 else 1
    grid = (B_pad // TB,)

    def resident(arr):
        # Full-array block, same block every grid step -> stays resident in VMEM.
        return pl.BlockSpec(arr.shape, lambda i: (0, 0))

    args = (x_flat,
            prepared["w1"], prepared["b1"],
            prepared["w2"], prepared["b2"],
            prepared["w3"], prepared["b3"],
            prepared["w4"], prepared["b4"])

    flops = 2 * B_pad * (IN_FEATURES * 1024 + 1024 * 256 + 256 * 256 + 256 * nc_pad)
    bytes_accessed = (
        int(x_flat.size) * x_flat.dtype.itemsize
        + sum(int(a.size) * a.dtype.itemsize for a in args[1:])
        + B_pad * nc_pad * 4
    )

    out = pl.pallas_call(
        partial(fcnn_kernel, n_sub=n_sub),
        out_shape=jax.ShapeDtypeStruct((B_pad, nc_pad), jnp.float32),
        grid=grid,
        in_specs=[pl.BlockSpec((TB, IN_FEATURES), lambda i: (i, 0))]
                 + [resident(a) for a in args[1:]],
        out_specs=pl.BlockSpec((TB, nc_pad), lambda i: (i, 0)),
        compiler_params=pltpu.CompilerParams(
            dimension_semantics=("parallel",),
            vmem_limit_bytes=32 << 20,
        ),
        cost_estimate=pl.CostEstimate(
            flops=flops, transcendentals=0, bytes_accessed=bytes_accessed),
    )(*args)

    return out[:B, :num_classes]


def init_params(key, num_classes):
    """Deterministic init mirroring torch.nn.Linear default U(-1/sqrt(fan_in), +)."""
    dims = [(512, 1024), (1024, 256), (256, 256), (256, num_classes)]
    params = []
    for (fan_in, fan_out) in dims:
        key, kw, kb = jax.random.split(key, 3)
        bound = 1.0 / (fan_in ** 0.5)
        w = jax.random.uniform(kw, (fan_in, fan_out), jnp.float32, -bound, bound)
        b = jax.random.uniform(kb, (1, fan_out), jnp.float32, -bound, bound)
        params.append((w, b))
    return params


def _reference_forward(x, prepared):
    """Plain-JAX reference with identical dtype choices as the kernel."""
    h = x.reshape(x.shape[0], -1).astype(jnp.bfloat16)
    for wk, bk, last in (("w1", "b1", False), ("w2", "b2", False),
                         ("w3", "b3", False), ("w4", "b4", True)):
        w, b = prepared[wk], prepared[bk]
        acc = jnp.dot(h, w, preferred_element_type=jnp.float32)
        if last:
            h = acc + b
        else:
            t = (acc.astype(jnp.bfloat16) + b) if b.dtype == jnp.bfloat16 else (acc + b)
            t = jnp.maximum(t, 0.2 * t)
            h = t.astype(jnp.bfloat16)
    return h[:, :prepared["num_classes"]]


if __name__ == "__main__":
    num_classes = 16
    key = jax.random.PRNGKey(0)
    kx, kp = jax.random.split(key)

    # Small input consistent with the forward: (B, C, H, W) with C*H*W = 512.
    x = jax.random.normal(kx, (2, 2, 16, 16), dtype=jnp.float32)
    params = init_params(kp, num_classes)
    prepared = prepare_params(params)   # one-time bf16 cast + lane padding

    logits = fcnn_forward(x, prepared)
    jax.block_until_ready(logits)
    assert logits.shape == (2, num_classes)

    ref = _reference_forward(x, prepared)
    assert jnp.allclose(logits, ref, atol=2e-2, rtol=2e-2), (
        float(jnp.max(jnp.abs(logits - ref))))

    print("KERNEL_OK")
</pallas_src>

<mosaic_0001>
module attributes {stable_mosaic.version = 11 : i64} {
  func.func @fcnn_kernel(%arg0: i32, %arg1: memref<16x512xf32, #tpu.memory_space<vmem>>, %arg2: memref<512x1024xbf16, #tpu.memory_space<vmem>>, %arg3: memref<1x1024xf32, #tpu.memory_space<vmem>>, %arg4: memref<1024x256xbf16, #tpu.memory_space<vmem>>, %arg5: memref<1x256xf32, #tpu.memory_space<vmem>>, %arg6: memref<256x256xbf16, #tpu.memory_space<vmem>>, %arg7: memref<1x256xf32, #tpu.memory_space<vmem>>, %arg8: memref<256x128xbf16, #tpu.memory_space<vmem>>, %arg9: memref<1x128xf32, #tpu.memory_space<vmem>>, %arg10: memref<16x128xf32, #tpu.memory_space<vmem>>) attributes {dimension_semantics = [#tpu.dimension_semantics<parallel>], iteration_bounds = array<i64: 1>, scalar_prefetch = 0 : i64, scratch_operands = 0 : i64, tpu.core_type = #tpu.core_type<tc>, window_params = [{transform_indices = @transform_0, window_bounds = array<i64: 16, 512>}, {pipeline_mode = #tpu.pipeline_mode<synchronous>, transform_indices = @transform_1, window_bounds = array<i64: 512, 1024>}, {pipeline_mode = #tpu.pipeline_mode<synchronous>, transform_indices = @transform_2, window_bounds = array<i64: 1, 1024>}, {pipeline_mode = #tpu.pipeline_mode<synchronous>, transform_indices = @transform_3, window_bounds = array<i64: 1024, 256>}, {pipeline_mode = #tpu.pipeline_mode<synchronous>, transform_indices = @transform_4, window_bounds = array<i64: 1, 256>}, {pipeline_mode = #tpu.pipeline_mode<synchronous>, transform_indices = @transform_5, window_bounds = array<i64: 256, 256>}, {pipeline_mode = #tpu.pipeline_mode<synchronous>, transform_indices = @transform_6, window_bounds = array<i64: 1, 256>}, {pipeline_mode = #tpu.pipeline_mode<synchronous>, transform_indices = @transform_7, window_bounds = array<i64: 256, 128>}, {pipeline_mode = #tpu.pipeline_mode<synchronous>, transform_indices = @transform_8, window_bounds = array<i64: 1, 128>}, {transform_indices = @transform_9, window_bounds = array<i64: 16, 128>}]} {
    %c0 = arith.constant 0 : index
    %c0_0 = arith.constant 0 : index
    %0 = vector.load %arg1[%c0, %c0_0] : memref<16x512xf32, #tpu.memory_space<vmem>>, vector<16x512xf32>
    %1 = arith.truncf %0 : vector<16x512xf32> to vector<16x512xbf16>
    %c0_1 = arith.constant 0 : index
    %c0_2 = arith.constant 0 : index
    %2 = vector.load %arg2[%c0_1, %c0_2] : memref<512x1024xbf16, #tpu.memory_space<vmem>>, vector<512x1024xbf16>
    %cst = arith.constant dense<0.000000e+00> : vector<16x1024xf32>
    %3 = tpu.matmul %1, %2, %cst {dimension_numbers = #tpu.dot_dimension_numbers<[1], [0], [0], [1], [0, 0, 1, 1], [], []>} : vector<16x512xbf16>, vector<512x1024xbf16>, vector<16x1024xf32> -> vector<16x1024xf32>
    %c0_3 = arith.constant 0 : index
    %c0_4 = arith.constant 0 : index
    %4 = vector.load %arg3[%c0_3, %c0_4] : memref<1x1024xf32, #tpu.memory_space<vmem>>, vector<1x1024xf32>
    %5 = vector.broadcast %4 : vector<1x1024xf32> to vector<16x1024xf32>
    %6 = arith.addf %3, %5 : vector<16x1024xf32>
    %cst_5 = arith.constant 2.000000e-01 : f32
    %7 = vector.broadcast %cst_5 : f32 to vector<16x1024xf32>
    %8 = arith.mulf %7, %6 : vector<16x1024xf32>
    %9 = arith.maximumf %6, %8 : vector<16x1024xf32>
    %10 = arith.truncf %9 : vector<16x1024xf32> to vector<16x1024xbf16>
    %c0_6 = arith.constant 0 : index
    %c0_7 = arith.constant 0 : index
    %11 = vector.load %arg4[%c0_6, %c0_7] : memref<1024x256xbf16, #tpu.memory_space<vmem>>, vector<1024x256xbf16>
    %cst_8 = arith.constant dense<0.000000e+00> : vector<16x256xf32>
    %12 = tpu.matmul %10, %11, %cst_8 {dimension_numbers = #tpu.dot_dimension_numbers<[1], [0], [0], [1], [0, 0, 1, 1], [], []>} : vector<16x1024xbf16>, vector<1024x256xbf16>, vector<16x256xf32> -> vector<16x256xf32>
    %c0_9 = arith.constant 0 : index
    %c0_10 = arith.constant 0 : index
    %13 = vector.load %arg5[%c0_9, %c0_10] : memref<1x256xf32, #tpu.memory_space<vmem>>, vector<1x256xf32>
    %14 = vector.broadcast %13 : vector<1x256xf32> to vector<16x256xf32>
    %15 = arith.addf %12, %14 : vector<16x256xf32>
    %cst_11 = arith.constant 2.000000e-01 : f32
    %16 = vector.broadcast %cst_11 : f32 to vector<16x256xf32>
    %17 = arith.mulf %16, %15 : vector<16x256xf32>
    %18 = arith.maximumf %15, %17 : vector<16x256xf32>
    %19 = arith.truncf %18 : vector<16x256xf32> to vector<16x256xbf16>
    %c0_12 = arith.constant 0 : index
    %c0_13 = arith.constant 0 : index
    %20 = vector.load %arg6[%c0_12, %c0_13] : memref<256x256xbf16, #tpu.memory_space<vmem>>, vector<256x256xbf16>
    %cst_14 = arith.constant dense<0.000000e+00> : vector<16x256xf32>
    %21 = tpu.matmul %19, %20, %cst_14 {dimension_numbers = #tpu.dot_dimension_numbers<[1], [0], [0], [1], [0, 0, 1, 1], [], []>} : vector<16x256xbf16>, vector<256x256xbf16>, vector<16x256xf32> -> vector<16x256xf32>
    %c0_15 = arith.constant 0 : index
    %c0_16 = arith.constant 0 : index
    %22 = vector.load %arg7[%c0_15, %c0_16] : memref<1x256xf32, #tpu.memory_space<vmem>>, vector<1x256xf32>
    %23 = vector.broadcast %22 : vector<1x256xf32> to vector<16x256xf32>
    %24 = arith.addf %21, %23 : vector<16x256xf32>
    %cst_17 = arith.constant 2.000000e-01 : f32
    %25 = vector.broadcast %cst_17 : f32 to vector<16x256xf32>
    %26 = arith.mulf %25, %24 : vector<16x256xf32>
    %27 = arith.maximumf %24, %26 : vector<16x256xf32>
    %28 = arith.truncf %27 : vector<16x256xf32> to vector<16x256xbf16>
    %c0_18 = arith.constant 0 : index
    %c0_19 = arith.constant 0 : index
    %29 = vector.load %arg8[%c0_18, %c0_19] : memref<256x128xbf16, #tpu.memory_space<vmem>>, vector<256x128xbf16>
    %cst_20 = arith.constant dense<0.000000e+00> : vector<16x128xf32>
    %30 = tpu.matmul %28, %29, %cst_20 {dimension_numbers = #tpu.dot_dimension_numbers<[1], [0], [0], [1], [0, 0, 1, 1], [], []>} : vector<16x256xbf16>, vector<256x128xbf16>, vector<16x128xf32> -> vector<16x128xf32>
    %c0_21 = arith.constant 0 : index
    %c0_22 = arith.constant 0 : index
    %31 = vector.load %arg9[%c0_21, %c0_22] : memref<1x128xf32, #tpu.memory_space<vmem>>, vector<1x128xf32>
    %32 = vector.broadcast %31 : vector<1x128xf32> to vector<16x128xf32>
    %33 = arith.addf %30, %32 : vector<16x128xf32>
    %c0_23 = arith.constant 0 : index
    %c0_24 = arith.constant 0 : index
    %34 = vector.load %arg10[%c0_23, %c0_24] : memref<16x128xf32, #tpu.memory_space<vmem>>, vector<16x128xf32>
    tpu.vector_store %arg10[%c0_23, %c0_24], %33 {strides = array<i32>} : memref<16x128xf32, #tpu.memory_space<vmem>>, vector<16x128xf32>,
    return
  }
  func.func @transform_0(%arg0: i32) -> (i32, i32) {
    %c0_i32 = arith.constant 0 : i32
    %c0_i32_0 = arith.constant 0 : i32
    return %arg0, %c0_i32 : i32, i32
  }
  func.func @transform_1(%arg0: i32) -> (i32, i32) {
    %c0_i32 = arith.constant 0 : i32
    %c0_i32_0 = arith.constant 0 : i32
    %c0_i32_1 = arith.constant 0 : i32
    return %c0_i32, %c0_i32_0 : i32, i32
  }
  func.func @transform_2(%arg0: i32) -> (i32, i32) {
    %c0_i32 = arith.constant 0 : i32
    %c0_i32_0 = arith.constant 0 : i32
    %c0_i32_1 = arith.constant 0 : i32
    return %c0_i32, %c0_i32_0 : i32, i32
  }
  func.func @transform_3(%arg0: i32) -> (i32, i32) {
    %c0_i32 = arith.constant 0 : i32
    %c0_i32_0 = arith.constant 0 : i32
    %c0_i32_1 = arith.constant 0 : i32
    return %c0_i32, %c0_i32_0 : i32, i32
  }
  func.func @transform_4(%arg0: i32) -> (i32, i32) {
    %c0_i32 = arith.constant 0 : i32
    %c0_i32_0 = arith.constant 0 : i32
    %c0_i32_1 = arith.constant 0 : i32
    return %c0_i32, %c0_i32_0 : i32, i32
  }
  func.func @transform_5(%arg0: i32) -> (i32, i32) {
    %c0_i32 = arith.constant 0 : i32
    %c0_i32_0 = arith.constant 0 : i32
    %c0_i32_1 = arith.constant 0 : i32
    return %c0_i32, %c0_i32_0 : i32, i32
  }
  func.func @transform_6(%arg0: i32) -> (i32, i32) {
    %c0_i32 = arith.constant 0 : i32
    %c0_i32_0 = arith.constant 0 : i32
    %c0_i32_1 = arith.constant 0 : i32
    return %c0_i32, %c0_i32_0 : i32, i32
  }
  func.func @transform_7(%arg0: i32) -> (i32, i32) {
    %c0_i32 = arith.constant 0 : i32
    %c0_i32_0 = arith.constant 0 : i32
    %c0_i32_1 = arith.constant 0 : i32
    return %c0_i32, %c0_i32_0 : i32, i32
  }
  func.func @transform_8(%arg0: i32) -> (i32, i32) {
    %c0_i32 = arith.constant 0 : i32
    %c0_i32_0 = arith.constant 0 : i32
    %c0_i32_1 = arith.constant 0 : i32
    return %c0_i32, %c0_i32_0 : i32, i32
  }
  func.func @transform_9(%arg0: i32) -> (i32, i32) {
    %c0_i32 = arith.constant 0 : i32
    %c0_i32_0 = arith.constant 0 : i32
    return %arg0, %c0_i32 : i32, i32
  }
}

</mosaic_0001>

<llo_original>
// kernel: tpu_custom_call.1
$region0: #{tpu_custom_call.1}
  #allocation0 [shape = 'u32[]', space=smem, size = 0x4, offset = 0x4, fixed_abs, tag = 'smem constant byte address 0x4 - core index']
  #allocation1 [shape = 'u32[72,128]{1,0:T(1,128)}', space=vmem, size = 0x9000, scoped, tag = 'internal scratch']
  %s0 = inlined_call_operand.hbm [shape: f32[16,512], index: 0, kind: input, shape index: {}]
  %s1 = inlined_call_operand.hbm [shape: bf16[512,1024], index: 1, kind: input, shape index: {}]
  %s2 = inlined_call_operand.hbm [shape: f32[1,1024], index: 2, kind: input, shape index: {}]
  %s3 = inlined_call_operand.hbm [shape: bf16[1024,256], index: 3, kind: input, shape index: {}]
  %s4 = inlined_call_operand.vmem [shape: f32[1,256], index: 4, kind: input, shape index: {}]
  %s5 = inlined_call_operand.hbm [shape: bf16[256,256], index: 5, kind: input, shape index: {}]
  %s6 = inlined_call_operand.vmem [shape: f32[1,256], index: 6, kind: input, shape index: {}]
  %s7 = inlined_call_operand.hbm [shape: bf16[256,128], index: 7, kind: input, shape index: {}]
  %s8 = inlined_call_operand.vmem [shape: f32[1,128], index: 8, kind: input, shape index: {}]
  %s9 = inlined_call_operand.hbm [shape: f32[16,128], index: 9, kind: output, shape index: {}]
  %s10 = sld [smem:[#allocation0]]
  $region70: #{tpu_custom_call.1} parent=0
    _
  %s12 = ssub.s32 1, %s10
  %s13 = scalar_select 0, %s12, %s10
  $region1: #{tpu_custom_call.1} parent=0
    #allocation2 [shape = 'u8[32768]{0}', space=vmem, size = 0x8000, scoped, tag = 'input window, operand 0, single buffered']
    #allocation3 [shape = 's32[1]{0}', space=sflag, size = 0x4, scoped, tag = 'scoped memory for tpu_custom_call.1']
    #allocation4 [shape = 's32[1]{0}', space=sflag, size = 0x4, scoped, tag = 'scoped memory for tpu_custom_call.1']
    #allocation5 [shape = 'u8[1048576]{0}', space=vmem, size = 0x100000, scoped, tag = 'input window, operand 1, single buffered']
    #allocation6 [shape = 's32[1]{0}', space=sflag, size = 0x4, scoped, tag = 'scoped memory for tpu_custom_call.1']
    #allocation7 [shape = 'u8[4096]{0}', space=vmem, size = 0x1000, scoped, tag = 'input window, operand 2, single buffered']
    #allocation8 [shape = 'u8[524288]{0}', space=vmem, size = 0x80000, scoped, tag = 'input window, operand 3, single buffered']
    #allocation9 [shape = 's32[1]{0}', space=sflag, size = 0x4, scoped, tag = 'scoped memory for tpu_custom_call.1']
    #allocation10 [shape = 'u8[131072]{0}', space=vmem, size = 0x20000, scoped, tag = 'input window, operand 5, single buffered']
    #allocation11 [shape = 'u8[65536]{0}', space=vmem, size = 0x10000, scoped, tag = 'input window, operand 7, single buffered']
    #allocation12 [shape = 's32[1]{0}', space=sflag, size = 0x4, scoped, tag = 'scoped memory for tpu_custom_call.1']
    #allocation13 [shape = 'u8[8192]{0}', space=vmem, size = 0x2000, scoped, tag = 'output window, operand 0, single buffered']
    %14 = vsyncpa [#allocation3], 0
    %15 = vsyncpa [#allocation6], 0
    %16 = vsyncpa [#allocation9], 0
    %17 = vsyncpa [#allocation12], 0
    %18 = vsyncpa [#allocation4], 0
    // Predicated region
    $region2: #{tpu_custom_call.1} parent=1 // pred_check
      _
    $region3: #{tpu_custom_call.1} parent=1 // pred_check_branch
      %20 = sbr.rel (0) target = $region5
    $region4: #{tpu_custom_call.1} parent=1 // pred_region
      %22 = vsyncadd [#allocation3], 0
      %s23 = sshll.u32 %s0, 4
      %s24 = int_to_ptr.hbm [resolvable:$true] %s23
      %s25 = sshll.u32 [#allocation2], 4
      %s26 = int_to_ptr.vmem [resolvable:$true] %s25
      %31 = dma.hbm_to_vmem [thread:$0]  %s24, 1024, %s26, [#allocation3], 512, 512, 32
    $region5: #{tpu_custom_call.1} parent=1 // pred_fallthru
      _
    // Predicated region
    $region6: #{tpu_custom_call.1} parent=1 // pred_check
      _
    $region7: #{tpu_custom_call.1} parent=1 // pred_check_branch
      %33 = sbr.rel (0) target = $region9
    $region8: #{tpu_custom_call.1} parent=1 // pred_region
      %35 = vsyncadd [#allocation6], 0
      %s36 = sshll.u32 %s1, 4
      %s37 = int_to_ptr.hbm [resolvable:$true] %s36
      %s38 = sshll.u32 [#allocation5], 4
      %s39 = int_to_ptr.vmem [resolvable:$true] %s38
      %44 = dma.hbm_to_vmem [thread:$0]  %s37, 32768, %s39, [#allocation6], 512, 512, 32
    $region9: #{tpu_custom_call.1} parent=1 // pred_fallthru
      _
    // Predicated region
    $region10: #{tpu_custom_call.1} parent=1 // pred_check
      _
    $region11: #{tpu_custom_call.1} parent=1 // pred_check_branch
      %46 = sbr.rel (0) target = $region13
    $region12: #{tpu_custom_call.1} parent=1 // pred_region
      %48 = vsyncadd [#allocation6], 0
      %s50 = sshll.u32 %s2, 4
      %s51 = int_to_ptr.hbm [resolvable:$true] %s50
      %s52 = sshll.u32 [#allocation7], 4
      %s53 = int_to_ptr.vmem [resolvable:$true] %s52
      %55 = dma.hbm_to_vmem [thread:$0]  %s51, 128, %s53, [#allocation6]
    $region13: #{tpu_custom_call.1} parent=1 // pred_fallthru
      _
    // Predicated region
    $region14: #{tpu_custom_call.1} parent=1 // pred_check
      _
    $region15: #{tpu_custom_call.1} parent=1 // pred_check_branch
      %57 = sbr.rel (0) target = $region17
    $region16: #{tpu_custom_call.1} parent=1 // pred_region
      %59 = vsyncadd [#allocation9], 0
      %s60 = sshll.u32 %s3, 4
      %s61 = int_to_ptr.hbm [resolvable:$true] %s60
      %s62 = sshll.u32 [#allocation8], 4
      %s63 = int_to_ptr.vmem [resolvable:$true] %s62
      %68 = dma.hbm_to_vmem [thread:$0]  %s61, 16384, %s63, [#allocation9], 128, 128, 8
    $region17: #{tpu_custom_call.1} parent=1 // pred_fallthru
      _
    // Predicated region
    $region18: #{tpu_custom_call.1} parent=1 // pred_check
      _
    $region19: #{tpu_custom_call.1} parent=1 // pred_check_branch
      %70 = sbr.rel (0) target = $region21
    $region20: #{tpu_custom_call.1} parent=1 // pred_region
      _
    $region21: #{tpu_custom_call.1} parent=1 // pred_fallthru
      _
    // Predicated region
    $region22: #{tpu_custom_call.1} parent=1 // pred_check
      _
    $region23: #{tpu_custom_call.1} parent=1 // pred_check_branch
      %72 = sbr.rel (0) target = $region25
    $region24: #{tpu_custom_call.1} parent=1 // pred_region
      %74 = vsyncadd [#allocation9], 0
      %s75 = sshll.u32 %s5, 4
      %s76 = int_to_ptr.hbm [resolvable:$true] %s75
      %s77 = sshll.u32 [#allocation10], 4
      %s78 = int_to_ptr.vmem [resolvable:$true] %s77
      %83 = dma.hbm_to_vmem [thread:$0]  %s76, 4096, %s78, [#allocation9], 128, 128, 8
    $region25: #{tpu_custom_call.1} parent=1 // pred_fallthru
      _
    // Predicated region
    $region26: #{tpu_custom_call.1} parent=1 // pred_check
      _
    $region27: #{tpu_custom_call.1} parent=1 // pred_check_branch
      %85 = sbr.rel (0) target = $region29
    $region28: #{tpu_custom_call.1} parent=1 // pred_region
      _
    $region29: #{tpu_custom_call.1} parent=1 // pred_fallthru
      _
    // Predicated region
    $region30: #{tpu_custom_call.1} parent=1 // pred_check
      _
    $region31: #{tpu_custom_call.1} parent=1 // pred_check_branch
      %87 = sbr.rel (0) target = $region33
    $region32: #{tpu_custom_call.1} parent=1 // pred_region
      %89 = vsyncadd [#allocation12], 0
      %s90 = sshll.u32 %s7, 4
      %s91 = int_to_ptr.hbm [resolvable:$true] %s90
      %s92 = sshll.u32 [#allocation11], 4
      %s93 = int_to_ptr.vmem [resolvable:$true] %s92
      %98 = dma.hbm_to_vmem [thread:$0]  %s91, 2048, %s93, [#allocation12], 64, 64, 4
    $region33: #{tpu_custom_call.1} parent=1 // pred_fallthru
      _
    // Predicated region
    $region34: #{tpu_custom_call.1} parent=1 // pred_check
      _
    $region35: #{tpu_custom_call.1} parent=1 // pred_check_branch
      %100 = sbr.rel (0) target = $region37
    $region36: #{tpu_custom_call.1} parent=1 // pred_region
      _
    $region37: #{tpu_custom_call.1} parent=1 // pred_fallthru
      _
    // Predicated region
    $region38: #{tpu_custom_call.1} parent=1 // pred_check
      _
    $region39: #{tpu_custom_call.1} parent=1 // pred_check_branch
      %102 = sbr.rel (0) target = $region41
    $region40: #{tpu_custom_call.1} parent=1 // pred_region
      %104 = dma.done [#allocation3], 1024
    $region41: #{tpu_custom_call.1} parent=1 // pred_fallthru
      _
    // Predicated region
    $region42: #{tpu_custom_call.1} parent=1 // pred_check
      _
    $region43: #{tpu_custom_call.1} parent=1 // pred_check_branch
      %106 = sbr.rel (0) target = $region45
    $region44: #{tpu_custom_call.1} parent=1 // pred_region
      %108 = dma.done [#allocation6], 32768
    $region45: #{tpu_custom_call.1} parent=1 // pred_fallthru
      _
    // Predicated region
    $region46: #{tpu_custom_call.1} parent=1 // pred_check
      _
    $region47: #{tpu_custom_call.1} parent=1 // pred_check_branch
      %110 = sbr.rel (0) target = $region49
    $region48: #{tpu_custom_call.1} parent=1 // pred_region
      %112 = dma.done [#allocation6], 128
    $region49: #{tpu_custom_call.1} parent=1 // pred_fallthru
      _
    // Predicated region
    $region50: #{tpu_custom_call.1} parent=1 // pred_check
      _
    $region51: #{tpu_custom_call.1} parent=1 // pred_check_branch
      %114 = sbr.rel (0) target = $region53
    $region52: #{tpu_custom_call.1} parent=1 // pred_region
      %116 = dma.done [#allocation9], 16384
    $region53: #{tpu_custom_call.1} parent=1 // pred_fallthru
      _
    // Predicated region
    $region54: #{tpu_custom_call.1} parent=1 // pred_check
      _
    $region55: #{tpu_custom_call.1} parent=1 // pred_check_branch
      %118 = sbr.rel (0) target = $region57
    $region56: #{tpu_custom_call.1} parent=1 // pred_region
      %120 = dma.done [#allocation9], 4096
    $region57: #{tpu_custom_call.1} parent=1 // pred_fallthru
      _
    // Predicated region
    $region58: #{tpu_custom_call.1} parent=1 // pred_check
      _
    $region59: #{tpu_custom_call.1} parent=1 // pred_check_branch
      %122 = sbr.rel (0) target = $region61
    $region60: #{tpu_custom_call.1} parent=1 // pred_region
      %124 = dma.done [#allocation12], 2048
    $region61: #{tpu_custom_call.1} parent=1 // pred_fallthru
      _
    %v125 = vld [vmem:[#allocation2] sm:$0xff]
    %v126 = vld [vmem:[#allocation2 + $0x8] sm:$0xff]
    %v127 = vld [vmem:[#allocation2 + $0x10] sm:$0xff]
    %v128 = vld [vmem:[#allocation2 + $0x18] sm:$0xff]
    %v129 = vld [vmem:[#allocation2 + $0x20] sm:$0xff]
    %v130 = vld [vmem:[#allocation2 + $0x28] sm:$0xff]
    %v131 = vld [vmem:[#allocation2 + $0x30] sm:$0xff]
    %v132 = vld [vmem:[#allocation2 + $0x38] sm:$0xff]
    %v133 = vpack.c.bf16 %v129, %v125
    %v134 = vpack.c.bf16 %v130, %v126
    %v135 = vpack.c.bf16 %v131, %v127
    %v136 = vpack.c.bf16 %v132, %v128
    %v137 = vld [vmem:[#allocation5] sm:$0xff]
    %v138 = vld [vmem:[#allocation5 + $0x8] sm:$0xff]
    %v139 = vld [vmem:[#allocation5 + $0x10] sm:$0xff]
    %v140 = vld [vmem:[#allocation5 + $0x18] sm:$0xff]
    %v141 = vld [vmem:[#allocation5 + $0x20] sm:$0xff]
    %v142 = vld [vmem:[#allocation5 + $0x28] sm:$0xff]
    %v143 = vld [vmem:[#allocation5 + $0x30] sm:$0xff]
    %v144 = vld [vmem:[#allocation5 + $0x38] sm:$0xff]
    %v145 = vld [vmem:[#allocation5 + $0x40] sm:$0xff]
    %v146 = vld [vmem:[#allocation5 + $0x48] sm:$0xff]
    %v147 = vld [vmem:[#allocation5 + $0x50] sm:$0xff]
    %v148 = vld [vmem:[#allocation5 + $0x58] sm:$0xff]
    %v149 = vld [vmem:[#allocation5 + $0x60] sm:$0xff]
    %v150 = vld [vmem:[#allocation5 + $0x68] sm:$0xff]
    %v151 = vld [vmem:[#allocation5 + $0x70] sm:$0xff]
    %v152 = vld [vmem:[#allocation5 + $0x78] sm:$0xff]
    %v153 = vld [vmem:[#allocation5 + $0x80] sm:$0xff]
    %v154 = vld [vmem:[#allocation5 + $0x88] sm:$0xff]
    %v155 = vld [vmem:[#allocation5 + $0x90] sm:$0xff]
    %v156 = vld [vmem:[#allocation5 + $0x98] sm:$0xff]
    %v157 = vld [vmem:[#allocation5 + $0xa0] sm:$0xff]
    %v158 = vld [vmem:[#allocation5 + $0xa8] sm:$0xff]
    %v159 = vld [vmem:[#allocation5 + $0xb0] sm:$0xff]
    %v160 = vld [vmem:[#allocation5 + $0xb8] sm:$0xff]
    %v161 = vld [vmem:[#allocation5 + $0xc0] sm:$0xff]
    %v162 = vld [vmem:[#allocation5 + $0xc8] sm:$0xff]
    %v163 = vld [vmem:[#allocation5 + $0xd0] sm:$0xff]
    %v164 = vld [vmem:[#allocation5 + $0xd8] sm:$0xff]
    %v165 = vld [vmem:[#allocation5 + $0xe0] sm:$0xff]
    %v166 = vld [vmem:[#allocation5 + $0xe8] sm:$0xff]
    %v167 = vld [vmem:[#allocation5 + $0xf0] sm:$0xff]
    %v168 = vld [vmem:[#allocation5 + $0xf8] sm:$0xff]
    %v169 = vld [vmem:[#allocation5 + $0x100] sm:$0xff]
    %v170 = vld [vmem:[#allocation5 + $0x108] sm:$0xff]
    %v171 = vld [vmem:[#allocation5 + $0x110] sm:$0xff]
    %v172 = vld [vmem:[#allocation5 + $0x118] sm:$0xff]
    %v173 = vld [vmem:[#allocation5 + $0x120] sm:$0xff]
    %v174 = vld [vmem:[#allocation5 + $0x128] sm:$0xff]
    %v175 = vld [vmem:[#allocation5 + $0x130] sm:$0xff]
    %v176 = vld [vmem:[#allocation5 + $0x138] sm:$0xff]
    %v177 = vld [vmem:[#allocation5 + $0x140] sm:$0xff]
    %v178 = vld [vmem:[#allocation5 + $0x148] sm:$0xff]
    %v179 = vld [vmem:[#allocation5 + $0x150] sm:$0xff]
    %v180 = vld [vmem:[#allocation5 + $0x158] sm:$0xff]
    %v181 = vld [vmem:[#allocation5 + $0x160] sm:$0xff]
    %v182 = vld [vmem:[#allocation5 + $0x168] sm:$0xff]
    %v183 = vld [vmem:[#allocation5 + $0x170] sm:$0xff]
    %v184 = vld [vmem:[#allocation5 + $0x178] sm:$0xff]
    %v185 = vld [vmem:[#allocation5 + $0x180] sm:$0xff]
    %v186 = vld [vmem:[#allocation5 + $0x188] sm:$0xff]
    %v187 = vld [vmem:[#allocation5 + $0x190] sm:$0xff]
    %v188 = vld [vmem:[#allocation5 + $0x198] sm:$0xff]
    %v189 = vld [vmem:[#allocation5 + $0x1a0] sm:$0xff]
    %v190 = vld [vmem:[#allocation5 + $0x1a8] sm:$0xff]
    %v191 = vld [vmem:[#allocation5 + $0x1b0] sm:$0xff]
    %v192 = vld [vmem:[#allocation5 + $0x1b8] sm:$0xff]
    %v193 = vld [vmem:[#allocation5 + $0x1c0] sm:$0xff]
    %v194 = vld [vmem:[#allocation5 + $0x1c8] sm:$0xff]
    %v195 = vld [vmem:[#allocation5 + $0x1d0] sm:$0xff]
    %v196 = vld [vmem:[#allocation5 + $0x1d8] sm:$0xff]
    %v197 = vld [vmem:[#allocation5 + $0x1e0] sm:$0xff]
    %v198 = vld [vmem:[#allocation5 + $0x1e8] sm:$0xff]
    %v199 = vld [vmem:[#allocation5 + $0x1f0] sm:$0xff]
    %v200 = vld [vmem:[#allocation5 + $0x1f8] sm:$0xff]
    %v201 = vld [vmem:[#allocation5 + $0x200] sm:$0xff]
    %v202 = vld [vmem:[#allocation5 + $0x208] sm:$0xff]
    %v203 = vld [vmem:[#allocation5 + $0x210] sm:$0xff]
    %v204 = vld [vmem:[#allocation5 + $0x218] sm:$0xff]
    %v205 = vld [vmem:[#allocation5 + $0x220] sm:$0xff]
    %v206 = vld [vmem:[#allocation5 + $0x228] sm:$0xff]
    %v207 = vld [vmem:[#allocation5 + $0x230] sm:$0xff]
    %v208 = vld [vmem:[#allocation5 + $0x238] sm:$0xff]
    %v209 = vld [vmem:[#allocation5 + $0x240] sm:$0xff]
    %v210 = vld [vmem:[#allocation5 + $0x248] sm:$0xff]
    %v211 = vld [vmem:[#allocation5 + $0x250] sm:$0xff]
    %v212 = vld [vmem:[#allocation5 + $0x258] sm:$0xff]
    %v213 = vld [vmem:[#allocation5 + $0x260] sm:$0xff]
    %v214 = vld [vmem:[#allocation5 + $0x268] sm:$0xff]
    %v215 = vld [vmem:[#allocation5 + $0x270] sm:$0xff]
    %v216 = vld [vmem:[#allocation5 + $0x278] sm:$0xff]
    %v217 = vld [vmem:[#allocation5 + $0x280] sm:$0xff]
    %v218 = vld [vmem:[#allocation5 + $0x288] sm:$0xff]
    %v219 = vld [vmem:[#allocation5 + $0x290] sm:$0xff]
    %v220 = vld [vmem:[#allocation5 + $0x298] sm:$0xff]
    %v221 = vld [vmem:[#allocation5 + $0x2a0] sm:$0xff]
    %v222 = vld [vmem:[#allocation5 + $0x2a8] sm:$0xff]
    %v223 = vld [vmem:[#allocation5 + $0x2b0] sm:$0xff]
    %v224 = vld [vmem:[#allocation5 + $0x2b8] sm:$0xff]
    %v225 = vld [vmem:[#allocation5 + $0x2c0] sm:$0xff]
    %v226 = vld [vmem:[#allocation5 + $0x2c8] sm:$0xff]
    %v227 = vld [vmem:[#allocation5 + $0x2d0] sm:$0xff]
    %v228 = vld [vmem:[#allocation5 + $0x2d8] sm:$0xff]
    %v229 = vld [vmem:[#allocation5 + $0x2e0] sm:$0xff]
    %v230 = vld [vmem:[#allocation5 + $0x2e8] sm:$0xff]
    %v231 = vld [vmem:[#allocation5 + $0x2f0] sm:$0xff]
    %v232 = vld [vmem:[#allocation5 + $0x2f8] sm:$0xff]
    %v233 = vld [vmem:[#allocation5 + $0x300] sm:$0xff]
    %v234 = vld [vmem:[#allocation5 + $0x308] sm:$0xff]
    %v235 = vld [vmem:[#allocation5 + $0x310] sm:$0xff]
    %v236 = vld [vmem:[#allocation5 + $0x318] sm:$0xff]
    %v237 = vld [vmem:[#allocation5 + $0x320] sm:$0xff]
    %v238 = vld [vmem:[#allocation5 + $0x328] sm:$0xff]
    %v239 = vld [vmem:[#allocation5 + $0x330] sm:$0xff]
    %v240 = vld [vmem:[#allocation5 + $0x338] sm:$0xff]
    %v241 = vld [vmem:[#allocation5 + $0x340] sm:$0xff]
    %v242 = vld [vmem:[#allocation5 + $0x348] sm:$0xff]
    %v243 = vld [vmem:[#allocation5 + $0x350] sm:$0xff]
    %v244 = vld [vmem:[#allocation5 + $0x358] sm:$0xff]
    %v245 = vld [vmem:[#allocation5 + $0x360] sm:$0xff]
    %v246 = vld [vmem:[#allocation5 + $0x368] sm:$0xff]
    %v247 = vld [vmem:[#allocation5 + $0x370] sm:$0xff]
    %v248 = vld [vmem:[#allocation5 + $0x378] sm:$0xff]
    %v249 = vld [vmem:[#allocation5 + $0x380] sm:$0xff]
    %v250 = vld [vmem:[#allocation5 + $0x388] sm:$0xff]
    %v251 = vld [vmem:[#allocation5 + $0x390] sm:$0xff]
    %v252 = vld [vmem:[#allocation5 + $0x398] sm:$0xff]
    %v253 = vld [vmem:[#allocation5 + $0x3a0] sm:$0xff]
    %v254 = vld [vmem:[#allocation5 + $0x3a8] sm:$0xff]
    %v255 = vld [vmem:[#allocation5 + $0x3b0] sm:$0xff]
    %v256 = vld [vmem:[#allocation5 + $0x3b8] sm:$0xff]
    %v257 = vld [vmem:[#allocation5 + $0x3c0] sm:$0xff]
    %v258 = vld [vmem:[#allocation5 + $0x3c8] sm:$0xff]
    %v259 = vld [vmem:[#allocation5 + $0x3d0] sm:$0xff]
    %v260 = vld [vmem:[#allocation5 + $0x3d8] sm:$0xff]
    %v261 = vld [vmem:[#allocation5 + $0x3e0] sm:$0xff]
    %v262 = vld [vmem:[#allocation5 + $0x3e8] sm:$0xff]
    %v263 = vld [vmem:[#allocation5 + $0x3f0] sm:$0xff]
    %v264 = vld [vmem:[#allocation5 + $0x3f8] sm:$0xff]
    %v265 = vld [vmem:[#allocation5 + $0x400] sm:$0xff]
    %v266 = vld [vmem:[#allocation5 + $0x408] sm:$0xff]
    %v267 = vld [vmem:[#allocation5 + $0x410] sm:$0xff]
    %v268 = vld [vmem:[#allocation5 + $0x418] sm:$0xff]
    %v269 = vld [vmem:[#allocation5 + $0x420] sm:$0xff]
    %v270 = vld [vmem:[#allocation5 + $0x428] sm:$0xff]
    %v271 = vld [vmem:[#allocation5 + $0x430] sm:$0xff]
    %v272 = vld [vmem:[#allocation5 + $0x438] sm:$0xff]
    %v273 = vld [vmem:[#allocation5 + $0x440] sm:$0xff]
    %v274 = vld [vmem:[#allocation5 + $0x448] sm:$0xff]
    %v275 = vld [vmem:[#allocation5 + $0x450] sm:$0xff]
    %v276 = vld [vmem:[#allocation5 + $0x458] sm:$0xff]
    %v277 = vld [vmem:[#allocation5 + $0x460] sm:$0xff]
    %v278 = vld [vmem:[#allocation5 + $0x468] sm:$0xff]
    %v279 = vld [vmem:[#allocation5 + $0x470] sm:$0xff]
    %v280 = vld [vmem:[#allocation5 + $0x478] sm:$0xff]
    %v281 = vld [vmem:[#allocation5 + $0x480] sm:$0xff]
    %v282 = vld [vmem:[#allocation5 + $0x488] sm:$0xff]
    %v283 = vld [vmem:[#allocation5 + $0x490] sm:$0xff]
    %v284 = vld [vmem:[#allocation5 + $0x498] sm:$0xff]
    %v285 = vld [vmem:[#allocation5 + $0x4a0] sm:$0xff]
    %v286 = vld [vmem:[#allocation5 + $0x4a8] sm:$0xff]
    %v287 = vld [vmem:[#allocation5 + $0x4b0] sm:$0xff]
    %v288 = vld [vmem:[#allocation5 + $0x4b8] sm:$0xff]
    %v289 = vld [vmem:[#allocation5 + $0x4c0] sm:$0xff]
    %v290 = vld [vmem:[#allocation5 + $0x4c8] sm:$0xff]
    %v291 = vld [vmem:[#allocation5 + $0x4d0] sm:$0xff]
    %v292 = vld [vmem:[#allocation5 + $0x4d8] sm:$0xff]
    %v293 = vld [vmem:[#allocation5 + $0x4e0] sm:$0xff]
    %v294 = vld [vmem:[#allocation5 + $0x4e8] sm:$0xff]
    %v295 = vld [vmem:[#allocation5 + $0x4f0] sm:$0xff]
    %v296 = vld [vmem:[#allocation5 + $0x4f8] sm:$0xff]
    %v297 = vld [vmem:[#allocation5 + $0x500] sm:$0xff]
    %v298 = vld [vmem:[#allocation5 + $0x508] sm:$0xff]
    %v299 = vld [vmem:[#allocation5 + $0x510] sm:$0xff]
    %v300 = vld [vmem:[#allocation5 + $0x518] sm:$0xff]
    %v301 = vld [vmem:[#allocation5 + $0x520] sm:$0xff]
    %v302 = vld [vmem:[#allocation5 + $0x528] sm:$0xff]
    %v303 = vld [vmem:[#allocation5 + $0x530] sm:$0xff]
    %v304 = vld [vmem:[#allocation5 + $0x538] sm:$0xff]
    %v305 = vld [vmem:[#allocation5 + $0x540] sm:$0xff]
    %v306 = vld [vmem:[#allocation5 + $0x548] sm:$0xff]
    %v307 = vld [vmem:[#allocation5 + $0x550] sm:$0xff]
    %v308 = vld [vmem:[#allocation5 + $0x558] sm:$0xff]
    %v309 = vld [vmem:[#allocation5 + $0x560] sm:$0xff]
    %v310 = vld [vmem:[#allocation5 + $0x568] sm:$0xff]
    %v311 = vld [vmem:[#allocation5 + $0x570] sm:$0xff]
    %v312 = vld [vmem:[#allocation5 + $0x578] sm:$0xff]
    %v313 = vld [vmem:[#allocation5 + $0x580] sm:$0xff]
    %v314 = vld [vmem:[#allocation5 + $0x588] sm:$0xff]
    %v315 = vld [vmem:[#allocation5 + $0x590] sm:$0xff]
    %v316 = vld [vmem:[#allocation5 + $0x598] sm:$0xff]
    %v317 = vld [vmem:[#allocation5 + $0x5a0] sm:$0xff]
    %v318 = vld [vmem:[#allocation5 + $0x5a8] sm:$0xff]
    %v319 = vld [vmem:[#allocation5 + $0x5b0] sm:$0xff]
    %v320 = vld [vmem:[#allocation5 + $0x5b8] sm:$0xff]
    %v321 = vld [vmem:[#allocation5 + $0x5c0] sm:$0xff]
    %v322 = vld [vmem:[#allocation5 + $0x5c8] sm:$0xff]
    %v323 = vld [vmem:[#allocation5 + $0x5d0] sm:$0xff]
    %v324 = vld [vmem:[#allocation5 + $0x5d8] sm:$0xff]
    %v325 = vld [vmem:[#allocation5 + $0x5e0] sm:$0xff]
    %v326 = vld [vmem:[#allocation5 + $0x5e8] sm:$0xff]
    %v327 = vld [vmem:[#allocation5 + $0x5f0] sm:$0xff]
    %v328 = vld [vmem:[#allocation5 + $0x5f8] sm:$0xff]
    %v329 = vld [vmem:[#allocation5 + $0x600] sm:$0xff]
    %v330 = vld [vmem:[#allocation5 + $0x608] sm:$0xff]
    %v331 = vld [vmem:[#allocation5 + $0x610] sm:$0xff]
    %v332 = vld [vmem:[#allocation5 + $0x618] sm:$0xff]
    %v333 = vld [vmem:[#allocation5 + $0x620] sm:$0xff]
    %v334 = vld [vmem:[#allocation5 + $0x628] sm:$0xff]
    %v335 = vld [vmem:[#allocation5 + $0x630] sm:$0xff]
    %v336 = vld [vmem:[#allocation5 + $0x638] sm:$0xff]
    %v337 = vld [vmem:[#allocation5 + $0x640] sm:$0xff]
    %v338 = vld [vmem:[#allocation5 + $0x648] sm:$0xff]
    %v339 = vld [vmem:[#allocation5 + $0x650] sm:$0xff]
    %v340 = vld [vmem:[#allocation5 + $0x658] sm:$0xff]
    %v341 = vld [vmem:[#allocation5 + $0x660] sm:$0xff]
    %v342 = vld [vmem:[#allocation5 + $0x668] sm:$0xff]
    %v343 = vld [vmem:[#allocation5 + $0x670] sm:$0xff]
    %v344 = vld [vmem:[#allocation5 + $0x678] sm:$0xff]
    %v345 = vld [vmem:[#allocation5 + $0x680] sm:$0xff]
    %v346 = vld [vmem:[#allocation5 + $0x688] sm:$0xff]
    %v347 = vld [vmem:[#allocation5 + $0x690] sm:$0xff]
    %v348 = vld [vmem:[#allocation5 + $0x698] sm:$0xff]
    %v349 = vld [vmem:[#allocation5 + $0x6a0] sm:$0xff]
    %v350 = vld [vmem:[#allocation5 + $0x6a8] sm:$0xff]
    %v351 = vld [vmem:[#allocation5 + $0x6b0] sm:$0xff]
    %v352 = vld [vmem:[#allocation5 + $0x6b8] sm:$0xff]
    %v353 = vld [vmem:[#allocation5 + $0x6c0] sm:$0xff]
    %v354 = vld [vmem:[#allocation5 + $0x6c8] sm:$0xff]
    %v355 = vld [vmem:[#allocation5 + $0x6d0] sm:$0xff]
    %v356 = vld [vmem:[#allocation5 + $0x6d8] sm:$0xff]
    %v357 = vld [vmem:[#allocation5 + $0x6e0] sm:$0xff]
    %v358 = vld [vmem:[#allocation5 + $0x6e8] sm:$0xff]
    %v359 = vld [vmem:[#allocation5 + $0x6f0] sm:$0xff]
    %v360 = vld [vmem:[#allocation5 + $0x6f8] sm:$0xff]
    %v361 = vld [vmem:[#allocation5 + $0x700] sm:$0xff]
    %v362 = vld [vmem:[#allocation5 + $0x708] sm:$0xff]
    %v363 = vld [vmem:[#allocation5 + $0x710] sm:$0xff]
    %v364 = vld [vmem:[#allocation5 + $0x718] sm:$0xff]
    %v365 = vld [vmem:[#allocation5 + $0x720] sm:$0xff]
    %v366 = vld [vmem:[#allocation5 + $0x728] sm:$0xff]
    %v367 = vld [vmem:[#allocation5 + $0x730] sm:$0xff]
    %v368 = vld [vmem:[#allocation5 + $0x738] sm:$0xff]
    %v369 = vld [vmem:[#allocation5 + $0x740] sm:$0xff]
    %v370 = vld [vmem:[#allocation5 + $0x748] sm:$0xff]
    %v371 = vld [vmem:[#allocation5 + $0x750] sm:$0xff]
    %v372 = vld [vmem:[#allocation5 + $0x758] sm:$0xff]
    %v373 = vld [vmem:[#allocation5 + $0x760] sm:$0xff]
    %v374 = vld [vmem:[#allocation5 + $0x768] sm:$0xff]
    %v375 = vld [vmem:[#allocation5 + $0x770] sm:$0xff]
    %v376 = vld [vmem:[#allocation5 + $0x778] sm:$0xff]
    %v377 = vld [vmem:[#allocation5 + $0x780] sm:$0xff]
    %v378 = vld [vmem:[#allocation5 + $0x788] sm:$0xff]
    %v379 = vld [vmem:[#allocation5 + $0x790] sm:$0xff]
    %v380 = vld [vmem:[#allocation5 + $0x798] sm:$0xff]
    %v381 = vld [vmem:[#allocation5 + $0x7a0] sm:$0xff]
    %v382 = vld [vmem:[#allocation5 + $0x7a8] sm:$0xff]
    %v383 = vld [vmem:[#allocation5 + $0x7b0] sm:$0xff]
    %v384 = vld [vmem:[#allocation5 + $0x7b8] sm:$0xff]
    %v385 = vld [vmem:[#allocation5 + $0x7c0] sm:$0xff]
    %v386 = vld [vmem:[#allocation5 + $0x7c8] sm:$0xff]
    %v387 = vld [vmem:[#allocation5 + $0x7d0] sm:$0xff]
    %v388 = vld [vmem:[#allocation5 + $0x7d8] sm:$0xff]
    %v389 = vld [vmem:[#allocation5 + $0x7e0] sm:$0xff]
    %v390 = vld [vmem:[#allocation5 + $0x7e8] sm:$0xff]
    %v391 = vld [vmem:[#allocation5 + $0x7f0] sm:$0xff]
    %v392 = vld [vmem:[#allocation5 + $0x7f8] sm:$0xff]
    %v393 = vld [vmem:[#allocation7] sm:$0xff]
    %v395 = vperm.slane %v393, 0
    %v396 = vperm.slane %v393, 1
    %v397 = vperm.slane %v393, 2
    %v398 = vperm.slane %v393, 3
    %v399 = vperm.slane %v393, 4
    %v400 = vperm.slane %v393, 5
    %v401 = vperm.slane %v393, 6
    %v402 = vperm.slane %v393, 7
    %v667 = vunpack.c.l.b16 %v137
    %v668 = vunpack.c.h.b16 %v137
    %v669 = vunpack.c.l.b16 %v138
    %v670 = vunpack.c.h.b16 %v138
    %v671 = vunpack.c.l.b16 %v139
    %v672 = vunpack.c.h.b16 %v139
    %v673 = vunpack.c.l.b16 %v140
    %v674 = vunpack.c.h.b16 %v140
    %v675 = vunpack.c.l.b16 %v141
    %v676 = vunpack.c.h.b16 %v141
    %v677 = vunpack.c.l.b16 %v142
    %v678 = vunpack.c.h.b16 %v142
    %v679 = vunpack.c.l.b16 %v143
    %v680 = vunpack.c.h.b16 %v143
    %v681 = vunpack.c.l.b16 %v144
    %v682 = vunpack.c.h.b16 %v144
    %v683 = vunpack.c.l.b16 %v145
    %v684 = vunpack.c.h.b16 %v145
    %v685 = vunpack.c.l.b16 %v146
    %v686 = vunpack.c.h.b16 %v146
    %v687 = vunpack.c.l.b16 %v147
    %v688 = vunpack.c.h.b16 %v147
    %v689 = vunpack.c.l.b16 %v148
    %v690 = vunpack.c.h.b16 %v148
    %v691 = vunpack.c.l.b16 %v149
    %v692 = vunpack.c.h.b16 %v149
    %v693 = vunpack.c.l.b16 %v150
    %v694 = vunpack.c.h.b16 %v150
    %v695 = vunpack.c.l.b16 %v151
    %v696 = vunpack.c.h.b16 %v151
    %v697 = vunpack.c.l.b16 %v152
    %v698 = vunpack.c.h.b16 %v152
    %v699 = vunpack.c.l.b16 %v153
    %v700 = vunpack.c.h.b16 %v153
    %v701 = vunpack.c.l.b16 %v154
    %v702 = vunpack.c.h.b16 %v154
    %v703 = vunpack.c.l.b16 %v155
    %v704 = vunpack.c.h.b16 %v155
    %v705 = vunpack.c.l.b16 %v156
    %v706 = vunpack.c.h.b16 %v156
    %v707 = vunpack.c.l.b16 %v157
    %v708 = vunpack.c.h.b16 %v157
    %v709 = vunpack.c.l.b16 %v158
    %v710 = vunpack.c.h.b16 %v158
    %v711 = vunpack.c.l.b16 %v159
    %v712 = vunpack.c.h.b16 %v159
    %v713 = vunpack.c.l.b16 %v160
    %v714 = vunpack.c.h.b16 %v160
    %v715 = vunpack.c.l.b16 %v161
    %v716 = vunpack.c.h.b16 %v161
    %v717 = vunpack.c.l.b16 %v162
    %v718 = vunpack.c.h.b16 %v162
    %v719 = vunpack.c.l.b16 %v163
    %v720 = vunpack.c.h.b16 %v163
    %v721 = vunpack.c.l.b16 %v164
    %v722 = vunpack.c.h.b16 %v164
    %v723 = vunpack.c.l.b16 %v165
    %v724 = vunpack.c.h.b16 %v165
    %v725 = vunpack.c.l.b16 %v166
    %v726 = vunpack.c.h.b16 %v166
    %v727 = vunpack.c.l.b16 %v167
    %v728 = vunpack.c.h.b16 %v167
    %v729 = vunpack.c.l.b16 %v168
    %v730 = vunpack.c.h.b16 %v168
    %v731 = vunpack.c.l.b16 %v169
    %v732 = vunpack.c.h.b16 %v169
    %v733 = vunpack.c.l.b16 %v170
    %v734 = vunpack.c.h.b16 %v170
    %v735 = vunpack.c.l.b16 %v171
    %v736 = vunpack.c.h.b16 %v171
    %v737 = vunpack.c.l.b16 %v172
    %v738 = vunpack.c.h.b16 %v172
    %v739 = vunpack.c.l.b16 %v173
    %v740 = vunpack.c.h.b16 %v173
    %v741 = vunpack.c.l.b16 %v174
    %v742 = vunpack.c.h.b16 %v174
    %v743 = vunpack.c.l.b16 %v175
    %v744 = vunpack.c.h.b16 %v175
    %v745 = vunpack.c.l.b16 %v176
    %v746 = vunpack.c.h.b16 %v176
    %v747 = vunpack.c.l.b16 %v177
    %v748 = vunpack.c.h.b16 %v177
    %v749 = vunpack.c.l.b16 %v178
    %v750 = vunpack.c.h.b16 %v178
    %v751 = vunpack.c.l.b16 %v179
    %v752 = vunpack.c.h.b16 %v179
    %v753 = vunpack.c.l.b16 %v180
    %v754 = vunpack.c.h.b16 %v180
    %v755 = vunpack.c.l.b16 %v181
    %v756 = vunpack.c.h.b16 %v181
    %v757 = vunpack.c.l.b16 %v182
    %v758 = vunpack.c.h.b16 %v182
    %v759 = vunpack.c.l.b16 %v183
    %v760 = vunpack.c.h.b16 %v183
    %v761 = vunpack.c.l.b16 %v184
    %v762 = vunpack.c.h.b16 %v184
    %v763 = vunpack.c.l.b16 %v185
    %v764 = vunpack.c.h.b16 %v185
    %v765 = vunpack.c.l.b16 %v186
    %v766 = vunpack.c.h.b16 %v186
    %v767 = vunpack.c.l.b16 %v187
    %v768 = vunpack.c.h.b16 %v187
    %v769 = vunpack.c.l.b16 %v188
    %v770 = vunpack.c.h.b16 %v188
    %v771 = vunpack.c.l.b16 %v189
    %v772 = vunpack.c.h.b16 %v189
    %v773 = vunpack.c.l.b16 %v190
    %v774 = vunpack.c.h.b16 %v190
    %v775 = vunpack.c.l.b16 %v191
    %v776 = vunpack.c.h.b16 %v191
    %v777 = vunpack.c.l.b16 %v192
    %v778 = vunpack.c.h.b16 %v192
    %v779 = vunpack.c.l.b16 %v193
    %v780 = vunpack.c.h.b16 %v193
    %v781 = vunpack.c.l.b16 %v194
    %v782 = vunpack.c.h.b16 %v194
    %v783 = vunpack.c.l.b16 %v195
    %v784 = vunpack.c.h.b16 %v195
    %v785 = vunpack.c.l.b16 %v196
    %v786 = vunpack.c.h.b16 %v196
    %v787 = vunpack.c.l.b16 %v197
    %v788 = vunpack.c.h.b16 %v197
    %v789 = vunpack.c.l.b16 %v198
    %v790 = vunpack.c.h.b16 %v198
    %v791 = vunpack.c.l.b16 %v199
    %v792 = vunpack.c.h.b16 %v199
    %v793 = vunpack.c.l.b16 %v200
    %v794 = vunpack.c.h.b16 %v200
    %v795 = vunpack.c.l.b16 %v201
    %v796 = vunpack.c.h.b16 %v201
    %v797 = vunpack.c.l.b16 %v202
    %v798 = vunpack.c.h.b16 %v202
    %v799 = vunpack.c.l.b16 %v203
    %v800 = vunpack.c.h.b16 %v203
    %v801 = vunpack.c.l.b16 %v204
    %v802 = vunpack.c.h.b16 %v204
    %v803 = vunpack.c.l.b16 %v205
    %v804 = vunpack.c.h.b16 %v205
    %v805 = vunpack.c.l.b16 %v206
    %v806 = vunpack.c.h.b16 %v206
    %v807 = vunpack.c.l.b16 %v207
    %v808 = vunpack.c.h.b16 %v207
    %v809 = vunpack.c.l.b16 %v208
    %v810 = vunpack.c.h.b16 %v208
    %v811 = vunpack.c.l.b16 %v209
    %v812 = vunpack.c.h.b16 %v209
    %v813 = vunpack.c.l.b16 %v210
    %v814 = vunpack.c.h.b16 %v210
    %v815 = vunpack.c.l.b16 %v211
    %v816 = vunpack.c.h.b16 %v211
    %v817 = vunpack.c.l.b16 %v212
    %v818 = vunpack.c.h.b16 %v212
    %v819 = vunpack.c.l.b16 %v213
    %v820 = vunpack.c.h.b16 %v213
    %v821 = vunpack.c.l.b16 %v214
    %v822 = vunpack.c.h.b16 %v214
    %v823 = vunpack.c.l.b16 %v215
    %v824 = vunpack.c.h.b16 %v215
    %v825 = vunpack.c.l.b16 %v216
    %v826 = vunpack.c.h.b16 %v216
    %v827 = vunpack.c.l.b16 %v217
    %v828 = vunpack.c.h.b16 %v217
    %v829 = vunpack.c.l.b16 %v218
    %v830 = vunpack.c.h.b16 %v218
    %v831 = vunpack.c.l.b16 %v219
    %v832 = vunpack.c.h.b16 %v219
    %v833 = vunpack.c.l.b16 %v220
    %v834 = vunpack.c.h.b16 %v220
    %v835 = vunpack.c.l.b16 %v221
    %v836 = vunpack.c.h.b16 %v221
    %v837 = vunpack.c.l.b16 %v222
    %v838 = vunpack.c.h.b16 %v222
    %v839 = vunpack.c.l.b16 %v223
    %v840 = vunpack.c.h.b16 %v223
    %v841 = vunpack.c.l.b16 %v224
    %v842 = vunpack.c.h.b16 %v224
    %v843 = vunpack.c.l.b16 %v225
    %v844 = vunpack.c.h.b16 %v225
    %v845 = vunpack.c.l.b16 %v226
    %v846 = vunpack.c.h.b16 %v226
    %v847 = vunpack.c.l.b16 %v227
    %v848 = vunpack.c.h.b16 %v227
    %v849 = vunpack.c.l.b16 %v228
    %v850 = vunpack.c.h.b16 %v228
    %v851 = vunpack.c.l.b16 %v229
    %v852 = vunpack.c.h.b16 %v229
    %v853 = vunpack.c.l.b16 %v230
    %v854 = vunpack.c.h.b16 %v230
    %v855 = vunpack.c.l.b16 %v231
    %v856 = vunpack.c.h.b16 %v231
    %v857 = vunpack.c.l.b16 %v232
    %v858 = vunpack.c.h.b16 %v232
    %v859 = vunpack.c.l.b16 %v233
    %v860 = vunpack.c.h.b16 %v233
    %v861 = vunpack.c.l.b16 %v234
    %v862 = vunpack.c.h.b16 %v234
    %v863 = vunpack.c.l.b16 %v235
    %v864 = vunpack.c.h.b16 %v235
    %v865 = vunpack.c.l.b16 %v236
    %v866 = vunpack.c.h.b16 %v236
    %v867 = vunpack.c.l.b16 %v237
    %v868 = vunpack.c.h.b16 %v237
    %v869 = vunpack.c.l.b16 %v238
    %v870 = vunpack.c.h.b16 %v238
    %v871 = vunpack.c.l.b16 %v239
    %v872 = vunpack.c.h.b16 %v239
    %v873 = vunpack.c.l.b16 %v240
    %v874 = vunpack.c.h.b16 %v240
    %v875 = vunpack.c.l.b16 %v241
    %v876 = vunpack.c.h.b16 %v241
    %v877 = vunpack.c.l.b16 %v242
    %v878 = vunpack.c.h.b16 %v242
    %v879 = vunpack.c.l.b16 %v243
    %v880 = vunpack.c.h.b16 %v243
    %v881 = vunpack.c.l.b16 %v244
    %v882 = vunpack.c.h.b16 %v244
    %v883 = vunpack.c.l.b16 %v245
    %v884 = vunpack.c.h.b16 %v245
    %v885 = vunpack.c.l.b16 %v246
    %v886 = vunpack.c.h.b16 %v246
    %v887 = vunpack.c.l.b16 %v247
    %v888 = vunpack.c.h.b16 %v247
    %v889 = vunpack.c.l.b16 %v248
    %v890 = vunpack.c.h.b16 %v248
    %v891 = vunpack.c.l.b16 %v249
    %v892 = vunpack.c.h.b16 %v249
    %v893 = vunpack.c.l.b16 %v250
    %v894 = vunpack.c.h.b16 %v250
    %v895 = vunpack.c.l.b16 %v251
    %v896 = vunpack.c.h.b16 %v251
    %v897 = vunpack.c.l.b16 %v252
    %v898 = vunpack.c.h.b16 %v252
    %v899 = vunpack.c.l.b16 %v253
    %v900 = vunpack.c.h.b16 %v253
    %v901 = vunpack.c.l.b16 %v254
    %v902 = vunpack.c.h.b16 %v254
    %v903 = vunpack.c.l.b16 %v255
    %v904 = vunpack.c.h.b16 %v255
    %v905 = vunpack.c.l.b16 %v256
    %v906 = vunpack.c.h.b16 %v256
    %v907 = vunpack.c.l.b16 %v257
    %v908 = vunpack.c.h.b16 %v257
    %v909 = vunpack.c.l.b16 %v258
    %v910 = vunpack.c.h.b16 %v258
    %v911 = vunpack.c.l.b16 %v259
    %v912 = vunpack.c.h.b16 %v259
    %v913 = vunpack.c.l.b16 %v260
    %v914 = vunpack.c.h.b16 %v260
    %v915 = vunpack.c.l.b16 %v261
    %v916 = vunpack.c.h.b16 %v261
    %v917 = vunpack.c.l.b16 %v262
    %v918 = vunpack.c.h.b16 %v262
    %v919 = vunpack.c.l.b16 %v263
    %v920 = vunpack.c.h.b16 %v263
    %v921 = vunpack.c.l.b16 %v264
    %v922 = vunpack.c.h.b16 %v264
    %v923 = vunpack.c.l.b16 %v265
    %v924 = vunpack.c.h.b16 %v265
    %v925 = vunpack.c.l.b16 %v266
    %v926 = vunpack.c.h.b16 %v266
    %v927 = vunpack.c.l.b16 %v267
    %v928 = vunpack.c.h.b16 %v267
    %v929 = vunpack.c.l.b16 %v268
    %v930 = vunpack.c.h.b16 %v268
    %v931 = vunpack.c.l.b16 %v269
    %v932 = vunpack.c.h.b16 %v269
    %v933 = vunpack.c.l.b16 %v270
    %v934 = vunpack.c.h.b16 %v270
    %v935 = vunpack.c.l.b16 %v271
    %v936 = vunpack.c.h.b16 %v271
    %v937 = vunpack.c.l.b16 %v272
    %v938 = vunpack.c.h.b16 %v272
    %v939 = vunpack.c.l.b16 %v273
    %v940 = vunpack.c.h.b16 %v273
    %v941 = vunpack.c.l.b16 %v274
    %v942 = vunpack.c.h.b16 %v274
    %v943 = vunpack.c.l.b16 %v275
    %v944 = vunpack.c.h.b16 %v275
    %v945 = vunpack.c.l.b16 %v276
    %v946 = vunpack.c.h.b16 %v276
    %v947 = vunpack.c.l.b16 %v277
    %v948 = vunpack.c.h.b16 %v277
    %v949 = vunpack.c.l.b16 %v278
    %v950 = vunpack.c.h.b16 %v278
    %v951 = vunpack.c.l.b16 %v279
    %v952 = vunpack.c.h.b16 %v279
    %v953 = vunpack.c.l.b16 %v280
    %v954 = vunpack.c.h.b16 %v280
    %v955 = vunpack.c.l.b16 %v281
    %v956 = vunpack.c.h.b16 %v281
    %v957 = vunpack.c.l.b16 %v282
    %v958 = vunpack.c.h.b16 %v282
    %v959 = vunpack.c.l.b16 %v283
    %v960 = vunpack.c.h.b16 %v283
    %v961 = vunpack.c.l.b16 %v284
    %v962 = vunpack.c.h.b16 %v284
    %v963 = vunpack.c.l.b16 %v285
    %v964 = vunpack.c.h.b16 %v285
    %v965 = vunpack.c.l.b16 %v286
    %v966 = vunpack.c.h.b16 %v286
    %v967 = vunpack.c.l.b16 %v287
    %v968 = vunpack.c.h.b16 %v287
    %v969 = vunpack.c.l.b16 %v288
    %v970 = vunpack.c.h.b16 %v288
    %v971 = vunpack.c.l.b16 %v289
    %v972 = vunpack.c.h.b16 %v289
    %v973 = vunpack.c.l.b16 %v290
    %v974 = vunpack.c.h.b16 %v290
    %v975 = vunpack.c.l.b16 %v291
    %v976 = vunpack.c.h.b16 %v291
    %v977 = vunpack.c.l.b16 %v292
    %v978 = vunpack.c.h.b16 %v292
    %v979 = vunpack.c.l.b16 %v293
    %v980 = vunpack.c.h.b16 %v293
    %v981 = vunpack.c.l.b16 %v294
    %v982 = vunpack.c.h.b16 %v294
    %v983 = vunpack.c.l.b16 %v295
    %v984 = vunpack.c.h.b16 %v295
    %v985 = vunpack.c.l.b16 %v296
    %v986 = vunpack.c.h.b16 %v296
    %v987 = vunpack.c.l.b16 %v297
    %v988 = vunpack.c.h.b16 %v297
    %v989 = vunpack.c.l.b16 %v298
    %v990 = vunpack.c.h.b16 %v298
    %v991 = vunpack.c.l.b16 %v299
    %v992 = vunpack.c.h.b16 %v299
    %v993 = vunpack.c.l.b16 %v300
    %v994 = vunpack.c.h.b16 %v300
    %v995 = vunpack.c.l.b16 %v301
    %v996 = vunpack.c.h.b16 %v301
    %v997 = vunpack.c.l.b16 %v302
    %v998 = vunpack.c.h.b16 %v302
    %v999 = vunpack.c.l.b16 %v303
    %v1000 = vunpack.c.h.b16 %v303
    %v1001 = vunpack.c.l.b16 %v304
    %v1002 = vunpack.c.h.b16 %v304
    %v1003 = vunpack.c.l.b16 %v305
    %v1004 = vunpack.c.h.b16 %v305
    %v1005 = vunpack.c.l.b16 %v306
    %v1006 = vunpack.c.h.b16 %v306
    %v1007 = vunpack.c.l.b16 %v307
    %v1008 = vunpack.c.h.b16 %v307
    %v1009 = vunpack.c.l.b16 %v308
    %v1010 = vunpack.c.h.b16 %v308
    %v1011 = vunpack.c.l.b16 %v309
    %v1012 = vunpack.c.h.b16 %v309
    %v1013 = vunpack.c.l.b16 %v310
    %v1014 = vunpack.c.h.b16 %v310
    %v1015 = vunpack.c.l.b16 %v311
    %v1016 = vunpack.c.h.b16 %v311
    %v1017 = vunpack.c.l.b16 %v312
    %v1018 = vunpack.c.h.b16 %v312
    %v1019 = vunpack.c.l.b16 %v313
    %v1020 = vunpack.c.h.b16 %v313
    %v1021 = vunpack.c.l.b16 %v314
    %v1022 = vunpack.c.h.b16 %v314
    %v1023 = vunpack.c.l.b16 %v315
    %v1024 = vunpack.c.h.b16 %v315
    %v1025 = vunpack.c.l.b16 %v316
    %v1026 = vunpack.c.h.b16 %v316
    %v1027 = vunpack.c.l.b16 %v317
    %v1028 = vunpack.c.h.b16 %v317
    %v1029 = vunpack.c.l.b16 %v318
    %v1030 = vunpack.c.h.b16 %v318
    %v1031 = vunpack.c.l.b16 %v319
    %v1032 = vunpack.c.h.b16 %v319
    %v1033 = vunpack.c.l.b16 %v320
    %v1034 = vunpack.c.h.b16 %v320
    %v1035 = vunpack.c.l.b16 %v321
    %v1036 = vunpack.c.h.b16 %v321
    %v1037 = vunpack.c.l.b16 %v322
    %v1038 = vunpack.c.h.b16 %v322
    %v1039 = vunpack.c.l.b16 %v323
    %v1040 = vunpack.c.h.b16 %v323
    %v1041 = vunpack.c.l.b16 %v324
    %v1042 = vunpack.c.h.b16 %v324
    %v1043 = vunpack.c.l.b16 %v325
    %v1044 = vunpack.c.h.b16 %v325
    %v1045 = vunpack.c.l.b16 %v326
    %v1046 = vunpack.c.h.b16 %v326
    %v1047 = vunpack.c.l.b16 %v327
    %v1048 = vunpack.c.h.b16 %v327
    %v1049 = vunpack.c.l.b16 %v328
    %v1050 = vunpack.c.h.b16 %v328
    %v1051 = vunpack.c.l.b16 %v329
    %v1052 = vunpack.c.h.b16 %v329
    %v1053 = vunpack.c.l.b16 %v330
    %v1054 = vunpack.c.h.b16 %v330
    %v1055 = vunpack.c.l.b16 %v331
    %v1056 = vunpack.c.h.b16 %v331
    %v1057 = vunpack.c.l.b16 %v332
    %v1058 = vunpack.c.h.b16 %v332
    %v1059 = vunpack.c.l.b16 %v333
    %v1060 = vunpack.c.h.b16 %v333
    %v1061 = vunpack.c.l.b16 %v334
    %v1062 = vunpack.c.h.b16 %v334
    %v1063 = vunpack.c.l.b16 %v335
    %v1064 = vunpack.c.h.b16 %v335
    %v1065 = vunpack.c.l.b16 %v336
    %v1066 = vunpack.c.h.b16 %v336
    %v1067 = vunpack.c.l.b16 %v337
    %v1068 = vunpack.c.h.b16 %v337
    %v1069 = vunpack.c.l.b16 %v338
    %v1070 = vunpack.c.h.b16 %v338
    %v1071 = vunpack.c.l.b16 %v339
    %v1072 = vunpack.c.h.b16 %v339
    %v1073 = vunpack.c.l.b16 %v340
    %v1074 = vunpack.c.h.b16 %v340
    %v1075 = vunpack.c.l.b16 %v341
    %v1076 = vunpack.c.h.b16 %v341
    %v1077 = vunpack.c.l.b16 %v342
    %v1078 = vunpack.c.h.b16 %v342
    %v1079 = vunpack.c.l.b16 %v343
    %v1080 = vunpack.c.h.b16 %v343
    %v1081 = vunpack.c.l.b16 %v344
    %v1082 = vunpack.c.h.b16 %v344
    %v1083 = vunpack.c.l.b16 %v345
    %v1084 = vunpack.c.h.b16 %v345
    %v1085 = vunpack.c.l.b16 %v346
    %v1086 = vunpack.c.h.b16 %v346
    %v1087 = vunpack.c.l.b16 %v347
    %v1088 = vunpack.c.h.b16 %v347
    %v1089 = vunpack.c.l.b16 %v348
    %v1090 = vunpack.c.h.b16 %v348
    %v1091 = vunpack.c.l.b16 %v349
    %v1092 = vunpack.c.h.b16 %v349
    %v1093 = vunpack.c.l.b16 %v350
    %v1094 = vunpack.c.h.b16 %v350
    %v1095 = vunpack.c.l.b16 %v351
    %v1096 = vunpack.c.h.b16 %v351
    %v1097 = vunpack.c.l.b16 %v352
    %v1098 = vunpack.c.h.b16 %v352
    %v1099 = vunpack.c.l.b16 %v353
    %v1100 = vunpack.c.h.b16 %v353
    %v1101 = vunpack.c.l.b16 %v354
    %v1102 = vunpack.c.h.b16 %v354
    %v1103 = vunpack.c.l.b16 %v355
    %v1104 = vunpack.c.h.b16 %v355
    %v1105 = vunpack.c.l.b16 %v356
    %v1106 = vunpack.c.h.b16 %v356
    %v1107 = vunpack.c.l.b16 %v357
    %v1108 = vunpack.c.h.b16 %v357
    %v1109 = vunpack.c.l.b16 %v358
    %v1110 = vunpack.c.h.b16 %v358
    %v1111 = vunpack.c.l.b16 %v359
    %v1112 = vunpack.c.h.b16 %v359
    %v1113 = vunpack.c.l.b16 %v360
    %v1114 = vunpack.c.h.b16 %v360
    %v1115 = vunpack.c.l.b16 %v361
    %v1116 = vunpack.c.h.b16 %v361
    %v1117 = vunpack.c.l.b16 %v362
    %v1118 = vunpack.c.h.b16 %v362
    %v1119 = vunpack.c.l.b16 %v363
    %v1120 = vunpack.c.h.b16 %v363
    %v1121 = vunpack.c.l.b16 %v364
    %v1122 = vunpack.c.h.b16 %v364
    %v1123 = vunpack.c.l.b16 %v365
    %v1124 = vunpack.c.h.b16 %v365
    %v1125 = vunpack.c.l.b16 %v366
    %v1126 = vunpack.c.h.b16 %v366
    %v1127 = vunpack.c.l.b16 %v367
    %v1128 = vunpack.c.h.b16 %v367
    %v1129 = vunpack.c.l.b16 %v368
    %v1130 = vunpack.c.h.b16 %v368
    %v1131 = vunpack.c.l.b16 %v369
    %v1132 = vunpack.c.h.b16 %v369
    %v1133 = vunpack.c.l.b16 %v370
    %v1134 = vunpack.c.h.b16 %v370
    %v1135 = vunpack.c.l.b16 %v371
    %v1136 = vunpack.c.h.b16 %v371
    %v1137 = vunpack.c.l.b16 %v372
    %v1138 = vunpack.c.h.b16 %v372
    %v1139 = vunpack.c.l.b16 %v373
    %v1140 = vunpack.c.h.b16 %v373
    %v1141 = vunpack.c.l.b16 %v374
    %v1142 = vunpack.c.h.b16 %v374
    %v1143 = vunpack.c.l.b16 %v375
    %v1144 = vunpack.c.h.b16 %v375
    %v1145 = vunpack.c.l.b16 %v376
    %v1146 = vunpack.c.h.b16 %v376
    %v1147 = vunpack.c.l.b16 %v377
    %v1148 = vunpack.c.h.b16 %v377
    %v1149 = vunpack.c.l.b16 %v378
    %v1150 = vunpack.c.h.b16 %v378
    %v1151 = vunpack.c.l.b16 %v379
    %v1152 = vunpack.c.h.b16 %v379
    %v1153 = vunpack.c.l.b16 %v380
    %v1154 = vunpack.c.h.b16 %v380
    %v1155 = vunpack.c.l.b16 %v381
    %v1156 = vunpack.c.h.b16 %v381
    %v1157 = vunpack.c.l.b16 %v382
    %v1158 = vunpack.c.h.b16 %v382
    %v1159 = vunpack.c.l.b16 %v383
    %v1160 = vunpack.c.h.b16 %v383
    %v1161 = vunpack.c.l.b16 %v384
    %v1162 = vunpack.c.h.b16 %v384
    %v1163 = vunpack.c.l.b16 %v385
    %v1164 = vunpack.c.h.b16 %v385
    %v1165 = vunpack.c.l.b16 %v386
    %v1166 = vunpack.c.h.b16 %v386
    %v1167 = vunpack.c.l.b16 %v387
    %v1168 = vunpack.c.h.b16 %v387
    %v1169 = vunpack.c.l.b16 %v388
    %v1170 = vunpack.c.h.b16 %v388
    %v1171 = vunpack.c.l.b16 %v389
    %v1172 = vunpack.c.h.b16 %v389
    %v1173 = vunpack.c.l.b16 %v390
    %v1174 = vunpack.c.h.b16 %v390
    %v1175 = vunpack.c.l.b16 %v391
    %v1176 = vunpack.c.h.b16 %v391
    %v1177 = vunpack.c.l.b16 %v392
    %v1178 = vunpack.c.h.b16 %v392
    %v1179 = vpack.c.b16 %v675, %v667
    %v1180 = vpack.c.b16 %v676, %v668
    %v1181 = vpack.c.b16 %v677, %v669
    %v1182 = vpack.c.b16 %v678, %v670
    %v1183 = vpack.c.b16 %v679, %v671
    %v1184 = vpack.c.b16 %v680, %v672
    %v1185 = vpack.c.b16 %v681, %v673
    %v1186 = vpack.c.b16 %v682, %v674
    %v1187 = vpack.c.b16 %v691, %v683
    %v1188 = vpack.c.b16 %v692, %v684
    %v1189 = vpack.c.b16 %v693, %v685
    %v1190 = vpack.c.b16 %v694, %v686
    %v1191 = vpack.c.b16 %v695, %v687
    %v1192 = vpack.c.b16 %v696, %v688
    %v1193 = vpack.c.b16 %v697, %v689
    %v1194 = vpack.c.b16 %v698, %v690
    %v1195 = vpack.c.b16 %v707, %v699
    %v1196 = vpack.c.b16 %v708, %v700
    %v1197 = vpack.c.b16 %v709, %v701
    %v1198 = vpack.c.b16 %v710, %v702
    %v1199 = vpack.c.b16 %v711, %v703
    %v1200 = vpack.c.b16 %v712, %v704
    %v1201 = vpack.c.b16 %v713, %v705
    %v1202 = vpack.c.b16 %v714, %v706
    %v1203 = vpack.c.b16 %v723, %v715
    %v1204 = vpack.c.b16 %v724, %v716
    %v1205 = vpack.c.b16 %v725, %v717
    %v1206 = vpack.c.b16 %v726, %v718
    %v1207 = vpack.c.b16 %v727, %v719
    %v1208 = vpack.c.b16 %v728, %v720
    %v1209 = vpack.c.b16 %v729, %v721
    %v1210 = vpack.c.b16 %v730, %v722
    %v1211 = vpack.c.b16 %v739, %v731
    %v1212 = vpack.c.b16 %v740, %v732
    %v1213 = vpack.c.b16 %v741, %v733
    %v1214 = vpack.c.b16 %v742, %v734
    %v1215 = vpack.c.b16 %v743, %v735
    %v1216 = vpack.c.b16 %v744, %v736
    %v1217 = vpack.c.b16 %v745, %v737
    %v1218 = vpack.c.b16 %v746, %v738
    %v1219 = vpack.c.b16 %v755, %v747
    %v1220 = vpack.c.b16 %v756, %v748
    %v1221 = vpack.c.b16 %v757, %v749
    %v1222 = vpack.c.b16 %v758, %v750
    %v1223 = vpack.c.b16 %v759, %v751
    %v1224 = vpack.c.b16 %v760, %v752
    %v1225 = vpack.c.b16 %v761, %v753
    %v1226 = vpack.c.b16 %v762, %v754
    %v1227 = vpack.c.b16 %v771, %v763
    %v1228 = vpack.c.b16 %v772, %v764
    %v1229 = vpack.c.b16 %v773, %v765
    %v1230 = vpack.c.b16 %v774, %v766
    %v1231 = vpack.c.b16 %v775, %v767
    %v1232 = vpack.c.b16 %v776, %v768
    %v1233 = vpack.c.b16 %v777, %v769
    %v1234 = vpack.c.b16 %v778, %v770
    %v1235 = vpack.c.b16 %v787, %v779
    %v1236 = vpack.c.b16 %v788, %v780
    %v1237 = vpack.c.b16 %v789, %v781
    %v1238 = vpack.c.b16 %v790, %v782
    %v1239 = vpack.c.b16 %v791, %v783
    %v1240 = vpack.c.b16 %v792, %v784
    %v1241 = vpack.c.b16 %v793, %v785
    %v1242 = vpack.c.b16 %v794, %v786
    %v1243 = vpack.c.b16 %v803, %v795
    %v1244 = vpack.c.b16 %v804, %v796
    %v1245 = vpack.c.b16 %v805, %v797
    %v1246 = vpack.c.b16 %v806, %v798
    %v1247 = vpack.c.b16 %v807, %v799
    %v1248 = vpack.c.b16 %v808, %v800
    %v1249 = vpack.c.b16 %v809, %v801
    %v1250 = vpack.c.b16 %v810, %v802
    %v1251 = vpack.c.b16 %v819, %v811
    %v1252 = vpack.c.b16 %v820, %v812
    %v1253 = vpack.c.b16 %v821, %v813
    %v1254 = vpack.c.b16 %v822, %v814
    %v1255 = vpack.c.b16 %v823, %v815
    %v1256 = vpack.c.b16 %v824, %v816
    %v1257 = vpack.c.b16 %v825, %v817
    %v1258 = vpack.c.b16 %v826, %v818
    %v1259 = vpack.c.b16 %v835, %v827
    %v1260 = vpack.c.b16 %v836, %v828
    %v1261 = vpack.c.b16 %v837, %v829
    %v1262 = vpack.c.b16 %v838, %v830
    %v1263 = vpack.c.b16 %v839, %v831
    %v1264 = vpack.c.b16 %v840, %v832
    %v1265 = vpack.c.b16 %v841, %v833
    %v1266 = vpack.c.b16 %v842, %v834
    %v1267 = vpack.c.b16 %v851, %v843
    %v1268 = vpack.c.b16 %v852, %v844
    %v1269 = vpack.c.b16 %v853, %v845
    %v1270 = vpack.c.b16 %v854, %v846
    %v1271 = vpack.c.b16 %v855, %v847
    %v1272 = vpack.c.b16 %v856, %v848
    %v1273 = vpack.c.b16 %v857, %v849
    %v1274 = vpack.c.b16 %v858, %v850
    %v1275 = vpack.c.b16 %v867, %v859
    %v1276 = vpack.c.b16 %v868, %v860
    %v1277 = vpack.c.b16 %v869, %v861
    %v1278 = vpack.c.b16 %v870, %v862
    %v1279 = vpack.c.b16 %v871, %v863
    %v1280 = vpack.c.b16 %v872, %v864
    %v1281 = vpack.c.b16 %v873, %v865
    %v1282 = vpack.c.b16 %v874, %v866
    %v1283 = vpack.c.b16 %v883, %v875
    %v1284 = vpack.c.b16 %v884, %v876
    %v1285 = vpack.c.b16 %v885, %v877
    %v1286 = vpack.c.b16 %v886, %v878
    %v1287 = vpack.c.b16 %v887, %v879
    %v1288 = vpack.c.b16 %v888, %v880
    %v1289 = vpack.c.b16 %v889, %v881
    %v1290 = vpack.c.b16 %v890, %v882
    %v1291 = vpack.c.b16 %v899, %v891
    %v1292 = vpack.c.b16 %v900, %v892
    %v1293 = vpack.c.b16 %v901, %v893
    %v1294 = vpack.c.b16 %v902, %v894
    %v1295 = vpack.c.b16 %v903, %v895
    %v1296 = vpack.c.b16 %v904, %v896
    %v1297 = vpack.c.b16 %v905, %v897
    %v1298 = vpack.c.b16 %v906, %v898
    %v1299 = vpack.c.b16 %v915, %v907
    %v1300 = vpack.c.b16 %v916, %v908
    %v1301 = vpack.c.b16 %v917, %v909
    %v1302 = vpack.c.b16 %v918, %v910
    %v1303 = vpack.c.b16 %v919, %v911
    %v1304 = vpack.c.b16 %v920, %v912
    %v1305 = vpack.c.b16 %v921, %v913
    %v1306 = vpack.c.b16 %v922, %v914
    %v1307 = vpack.c.b16 %v931, %v923
    %v1308 = vpack.c.b16 %v932, %v924
    %v1309 = vpack.c.b16 %v933, %v925
    %v1310 = vpack.c.b16 %v934, %v926
    %v1311 = vpack.c.b16 %v935, %v927
    %v1312 = vpack.c.b16 %v936, %v928
    %v1313 = vpack.c.b16 %v937, %v929
    %v1314 = vpack.c.b16 %v938, %v930
    %v1315 = vpack.c.b16 %v947, %v939
    %v1316 = vpack.c.b16 %v948, %v940
    %v1317 = vpack.c.b16 %v949, %v941
    %v1318 = vpack.c.b16 %v950, %v942
    %v1319 = vpack.c.b16 %v951, %v943
    %v1320 = vpack.c.b16 %v952, %v944
    %v1321 = vpack.c.b16 %v953, %v945
    %v1322 = vpack.c.b16 %v954, %v946
    %v1323 = vpack.c.b16 %v963, %v955
    %v1324 = vpack.c.b16 %v964, %v956
    %v1325 = vpack.c.b16 %v965, %v957
    %v1326 = vpack.c.b16 %v966, %v958
    %v1327 = vpack.c.b16 %v967, %v959
    %v1328 = vpack.c.b16 %v968, %v960
    %v1329 = vpack.c.b16 %v969, %v961
    %v1330 = vpack.c.b16 %v970, %v962
    %v1331 = vpack.c.b16 %v979, %v971
    %v1332 = vpack.c.b16 %v980, %v972
    %v1333 = vpack.c.b16 %v981, %v973
    %v1334 = vpack.c.b16 %v982, %v974
    %v1335 = vpack.c.b16 %v983, %v975
    %v1336 = vpack.c.b16 %v984, %v976
    %v1337 = vpack.c.b16 %v985, %v977
    %v1338 = vpack.c.b16 %v986, %v978
    %v1339 = vpack.c.b16 %v995, %v987
    %v1340 = vpack.c.b16 %v996, %v988
    %v1341 = vpack.c.b16 %v997, %v989
    %v1342 = vpack.c.b16 %v998, %v990
    %v1343 = vpack.c.b16 %v999, %v991
    %v1344 = vpack.c.b16 %v1000, %v992
    %v1345 = vpack.c.b16 %v1001, %v993
    %v1346 = vpack.c.b16 %v1002, %v994
    %v1347 = vpack.c.b16 %v1011, %v1003
    %v1348 = vpack.c.b16 %v1012, %v1004
    %v1349 = vpack.c.b16 %v1013, %v1005
    %v1350 = vpack.c.b16 %v1014, %v1006
    %v1351 = vpack.c.b16 %v1015, %v1007
    %v1352 = vpack.c.b16 %v1016, %v1008
    %v1353 = vpack.c.b16 %v1017, %v1009
    %v1354 = vpack.c.b16 %v1018, %v1010
    %v1355 = vpack.c.b16 %v1027, %v1019
    %v1356 = vpack.c.b16 %v1028, %v1020
    %v1357 = vpack.c.b16 %v1029, %v1021
    %v1358 = vpack.c.b16 %v1030, %v1022
    %v1359 = vpack.c.b16 %v1031, %v1023
    %v1360 = vpack.c.b16 %v1032, %v1024
    %v1361 = vpack.c.b16 %v1033, %v1025
    %v1362 = vpack.c.b16 %v1034, %v1026
    %v1363 = vpack.c.b16 %v1043, %v1035
    %v1364 = vpack.c.b16 %v1044, %v1036
    %v1365 = vpack.c.b16 %v1045, %v1037
    %v1366 = vpack.c.b16 %v1046, %v1038
    %v1367 = vpack.c.b16 %v1047, %v1039
    %v1368 = vpack.c.b16 %v1048, %v1040
    %v1369 = vpack.c.b16 %v1049, %v1041
    %v1370 = vpack.c.b16 %v1050, %v1042
    %v1371 = vpack.c.b16 %v1059, %v1051
    %v1372 = vpack.c.b16 %v1060, %v1052
    %v1373 = vpack.c.b16 %v1061, %v1053
    %v1374 = vpack.c.b16 %v1062, %v1054
    %v1375 = vpack.c.b16 %v1063, %v1055
    %v1376 = vpack.c.b16 %v1064, %v1056
    %v1377 = vpack.c.b16 %v1065, %v1057
    %v1378 = vpack.c.b16 %v1066, %v1058
    %v1379 = vpack.c.b16 %v1075, %v1067
    %v1380 = vpack.c.b16 %v1076, %v1068
    %v1381 = vpack.c.b16 %v1077, %v1069
    %v1382 = vpack.c.b16 %v1078, %v1070
    %v1383 = vpack.c.b16 %v1079, %v1071
    %v1384 = vpack.c.b16 %v1080, %v1072
    %v1385 = vpack.c.b16 %v1081, %v1073
    %v1386 = vpack.c.b16 %v1082, %v1074
    %v1387 = vpack.c.b16 %v1091, %v1083
    %v1388 = vpack.c.b16 %v1092, %v1084
    %v1389 = vpack.c.b16 %v1093, %v1085
    %v1390 = vpack.c.b16 %v1094, %v1086
    %v1391 = vpack.c.b16 %v1095, %v1087
    %v1392 = vpack.c.b16 %v1096, %v1088
    %v1393 = vpack.c.b16 %v1097, %v1089
    %v1394 = vpack.c.b16 %v1098, %v1090
    %v1395 = vpack.c.b16 %v1107, %v1099
    %v1396 = vpack.c.b16 %v1108, %v1100
    %v1397 = vpack.c.b16 %v1109, %v1101
    %v1398 = vpack.c.b16 %v1110, %v1102
    %v1399 = vpack.c.b16 %v1111, %v1103
    %v1400 = vpack.c.b16 %v1112, %v1104
    %v1401 = vpack.c.b16 %v1113, %v1105
    %v1402 = vpack.c.b16 %v1114, %v1106
    %v1403 = vpack.c.b16 %v1123, %v1115
    %v1404 = vpack.c.b16 %v1124, %v1116
    %v1405 = vpack.c.b16 %v1125, %v1117
    %v1406 = vpack.c.b16 %v1126, %v1118
    %v1407 = vpack.c.b16 %v1127, %v1119
    %v1408 = vpack.c.b16 %v1128, %v1120
    %v1409 = vpack.c.b16 %v1129, %v1121
    %v1410 = vpack.c.b16 %v1130, %v1122
    %v1411 = vpack.c.b16 %v1139, %v1131
    %v1412 = vpack.c.b16 %v1140, %v1132
    %v1413 = vpack.c.b16 %v1141, %v1133
    %v1414 = vpack.c.b16 %v1142, %v1134
    %v1415 = vpack.c.b16 %v1143, %v1135
    %v1416 = vpack.c.b16 %v1144, %v1136
    %v1417 = vpack.c.b16 %v1145, %v1137
    %v1418 = vpack.c.b16 %v1146, %v1138
    %v1419 = vpack.c.b16 %v1155, %v1147
    %v1420 = vpack.c.b16 %v1156, %v1148
    %v1421 = vpack.c.b16 %v1157, %v1149
    %v1422 = vpack.c.b16 %v1158, %v1150
    %v1423 = vpack.c.b16 %v1159, %v1151
    %v1424 = vpack.c.b16 %v1160, %v1152
    %v1425 = vpack.c.b16 %v1161, %v1153
    %v1426 = vpack.c.b16 %v1162, %v1154
    %v1427 = vpack.c.b16 %v1171, %v1163
    %v1428 = vpack.c.b16 %v1172, %v1164
    %v1429 = vpack.c.b16 %v1173, %v1165
    %v1430 = vpack.c.b16 %v1174, %v1166
    %v1431 = vpack.c.b16 %v1175, %v1167
    %v1432 = vpack.c.b16 %v1176, %v1168
    %v1433 = vpack.c.b16 %v1177, %v1169
    %v1434 = vpack.c.b16 %v1178, %v1170
    %1691 = vmatpush.bf16.msra.mxu0 %v1235
    %1692 = vmatpush.bf16.msra.mxu0 %v1227
    %1693 = vmatpush.bf16.msra.mxu0 %v1219
    %1694 = vmatpush.bf16.msra.mxu0 %v1211
    %1695 = vmatpush.bf16.msra.mxu0 %v1203
    %1696 = vmatpush.bf16.msra.mxu0 %v1195
    %1697 = vmatpush.bf16.msra.mxu0 %v1187
    %1698 = vmatpush.bf16.msra.mxu0 %v1179
    %1699 = vmatmul.bf16.gmra.mxu0 %v133
    %v1700 = vpop.f32.mrf.mxu0
    %v1701 = vadd.f32 %v395, %v1700
    %v1702 = vpop.f32.mrf.mxu0
    %v1703 = vadd.f32 %v395, %v1702
    %1704 = vdwg.mxu0
    %1705 = vmatpush.bf16.msra.mxu0 %v1299
    %1706 = vmatpush.bf16.msra.mxu0 %v1291
    %1707 = vmatpush.bf16.msra.mxu0 %v1283
    %1708 = vmatpush.bf16.msra.mxu0 %v1275
    %1709 = vmatpush.bf16.msra.mxu0 %v1267
    %1710 = vmatpush.bf16.msra.mxu0 %v1259
    %1711 = vmatpush.bf16.msra.mxu0 %v1251
    %1712 = vmatpush.bf16.msra.mxu0 %v1243
    %1713 = vmatmul.bf16.gmra.mxu0 %v134
    %v1714 = vpop.f32.mrf.mxu0
    %v1715 = vadd.f32 %v1701, %v1714
    %v1716 = vpop.f32.mrf.mxu0
    %v1717 = vadd.f32 %v1703, %v1716
    %1718 = vdwg.mxu0
    %1719 = vmatpush.bf16.msra.mxu0 %v1363
    %1720 = vmatpush.bf16.msra.mxu0 %v1355
    %1721 = vmatpush.bf16.msra.mxu0 %v1347
    %1722 = vmatpush.bf16.msra.mxu0 %v1339
    %1723 = vmatpush.bf16.msra.mxu0 %v1331
    %1724 = vmatpush.bf16.msra.mxu0 %v1323
    %1725 = vmatpush.bf16.msra.mxu0 %v1315
    %1726 = vmatpush.bf16.msra.mxu0 %v1307
    %1727 = vmatmul.bf16.gmra.mxu0 %v135
    %v1728 = vpop.f32.mrf.mxu0
    %v1729 = vadd.f32 %v1715, %v1728
    %v1730 = vpop.f32.mrf.mxu0
    %v1731 = vadd.f32 %v1717, %v1730
    %1732 = vdwg.mxu0
    %1733 = vmatpush.bf16.msra.mxu0 %v1427
    %1734 = vmatpush.bf16.msra.mxu0 %v1419
    %1735 = vmatpush.bf16.msra.mxu0 %v1411
    %1736 = vmatpush.bf16.msra.mxu0 %v1403
    %1737 = vmatpush.bf16.msra.mxu0 %v1395
    %1738 = vmatpush.bf16.msra.mxu0 %v1387
    %1739 = vmatpush.bf16.msra.mxu0 %v1379
    %1740 = vmatpush.bf16.msra.mxu0 %v1371
    %1741 = vmatmul.bf16.gmra.mxu0 %v136
    %v1742 = vpop.f32.mrf.mxu0
    %v1743 = vadd.f32 %v1729, %v1742
    %v1744 = vpop.f32.mrf.mxu0
    %v1745 = vadd.f32 %v1731, %v1744
    %1746 = vdwg.mxu0
    %1747 = vmatpush.bf16.msra.mxu0 %v1236
    %1748 = vmatpush.bf16.msra.mxu0 %v1228
    %1749 = vmatpush.bf16.msra.mxu0 %v1220
    %1750 = vmatpush.bf16.msra.mxu0 %v1212
    %1751 = vmatpush.bf16.msra.mxu0 %v1204
    %1752 = vmatpush.bf16.msra.mxu0 %v1196
    %1753 = vmatpush.bf16.msra.mxu0 %v1188
    %1754 = vmatpush.bf16.msra.mxu0 %v1180
    %1755 = vmatmul.bf16.gmra.mxu0 %v133
    %v1756 = vpop.f32.mrf.mxu0
    %v1757 = vadd.f32 %v396, %v1756
    %v1758 = vpop.f32.mrf.mxu0
    %v1759 = vadd.f32 %v396, %v1758
    %1760 = vdwg.mxu0
    %1761 = vmatpush.bf16.msra.mxu0 %v1300
    %1762 = vmatpush.bf16.msra.mxu0 %v1292
    %1763 = vmatpush.bf16.msra.mxu0 %v1284
    %1764 = vmatpush.bf16.msra.mxu0 %v1276
    %1765 = vmatpush.bf16.msra.mxu0 %v1268
    %1766 = vmatpush.bf16.msra.mxu0 %v1260
    %1767 = vmatpush.bf16.msra.mxu0 %v1252
    %1768 = vmatpush.bf16.msra.mxu0 %v1244
    %1769 = vmatmul.bf16.gmra.mxu0 %v134
    %v1770 = vpop.f32.mrf.mxu0
    %v1771 = vadd.f32 %v1757, %v1770
    %v1772 = vpop.f32.mrf.mxu0
    %v1773 = vadd.f32 %v1759, %v1772
    %1774 = vdwg.mxu0
    %1775 = vmatpush.bf16.msra.mxu0 %v1364
    %1776 = vmatpush.bf16.msra.mxu0 %v1356
    %1777 = vmatpush.bf16.msra.mxu0 %v1348
    %1778 = vmatpush.bf16.msra.mxu0 %v1340
    %1779 = vmatpush.bf16.msra.mxu0 %v1332
    %1780 = vmatpush.bf16.msra.mxu0 %v1324
    %1781 = vmatpush.bf16.msra.mxu0 %v1316
    %1782 = vmatpush.bf16.msra.mxu0 %v1308
    %1783 = vmatmul.bf16.gmra.mxu0 %v135
    %v1784 = vpop.f32.mrf.mxu0
    %v1785 = vadd.f32 %v1771, %v1784
    %v1786 = vpop.f32.mrf.mxu0
    %v1787 = vadd.f32 %v1773, %v1786
    %1788 = vdwg.mxu0
    %1789 = vmatpush.bf16.msra.mxu0 %v1428
    %1790 = vmatpush.bf16.msra.mxu0 %v1420
    %1791 = vmatpush.bf16.msra.mxu0 %v1412
    %1792 = vmatpush.bf16.msra.mxu0 %v1404
    %1793 = vmatpush.bf16.msra.mxu0 %v1396
    %1794 = vmatpush.bf16.msra.mxu0 %v1388
    %1795 = vmatpush.bf16.msra.mxu0 %v1380
    %1796 = vmatpush.bf16.msra.mxu0 %v1372
    %1797 = vmatmul.bf16.gmra.mxu0 %v136
    %v1798 = vpop.f32.mrf.mxu0
    %v1799 = vadd.f32 %v1785, %v1798
    %v1800 = vpop.f32.mrf.mxu0
    %v1801 = vadd.f32 %v1787, %v1800
    %1802 = vdwg.mxu0
    %1803 = vmatpush.bf16.msra.mxu0 %v1237
    %1804 = vmatpush.bf16.msra.mxu0 %v1229
    %1805 = vmatpush.bf16.msra.mxu0 %v1221
    %1806 = vmatpush.bf16.msra.mxu0 %v1213
    %1807 = vmatpush.bf16.msra.mxu0 %v1205
    %1808 = vmatpush.bf16.msra.mxu0 %v1197
    %1809 = vmatpush.bf16.msra.mxu0 %v1189
    %1810 = vmatpush.bf16.msra.mxu0 %v1181
    %1811 = vmatmul.bf16.gmra.mxu0 %v133
    %v1812 = vpop.f32.mrf.mxu0
    %v1813 = vadd.f32 %v397, %v1812
    %v1814 = vpop.f32.mrf.mxu0
    %v1815 = vadd.f32 %v397, %v1814
    %1816 = vdwg.mxu0
    %1817 = vmatpush.bf16.msra.mxu0 %v1301
    %1818 = vmatpush.bf16.msra.mxu0 %v1293
    %1819 = vmatpush.bf16.msra.mxu0 %v1285
    %1820 = vmatpush.bf16.msra.mxu0 %v1277
    %1821 = vmatpush.bf16.msra.mxu0 %v1269
    %1822 = vmatpush.bf16.msra.mxu0 %v1261
    %1823 = vmatpush.bf16.msra.mxu0 %v1253
    %1824 = vmatpush.bf16.msra.mxu0 %v1245
    %1825 = vmatmul.bf16.gmra.mxu0 %v134
    %v1826 = vpop.f32.mrf.mxu0
    %v1827 = vadd.f32 %v1813, %v1826
    %v1828 = vpop.f32.mrf.mxu0
    %v1829 = vadd.f32 %v1815, %v1828
    %1830 = vdwg.mxu0
    %1831 = vmatpush.bf16.msra.mxu0 %v1365
    %1832 = vmatpush.bf16.msra.mxu0 %v1357
    %1833 = vmatpush.bf16.msra.mxu0 %v1349
    %1834 = vmatpush.bf16.msra.mxu0 %v1341
    %1835 = vmatpush.bf16.msra.mxu0 %v1333
    %1836 = vmatpush.bf16.msra.mxu0 %v1325
    %1837 = vmatpush.bf16.msra.mxu0 %v1317
    %1838 = vmatpush.bf16.msra.mxu0 %v1309
    %1839 = vmatmul.bf16.gmra.mxu0 %v135
    %v1840 = vpop.f32.mrf.mxu0
    %v1841 = vadd.f32 %v1827, %v1840
    %v1842 = vpop.f32.mrf.mxu0
    %v1843 = vadd.f32 %v1829, %v1842
    %1844 = vdwg.mxu0
    %1845 = vmatpush.bf16.msra.mxu0 %v1429
    %1846 = vmatpush.bf16.msra.mxu0 %v1421
    %1847 = vmatpush.bf16.msra.mxu0 %v1413
    %1848 = vmatpush.bf16.msra.mxu0 %v1405
    %1849 = vmatpush.bf16.msra.mxu0 %v1397
    %1850 = vmatpush.bf16.msra.mxu0 %v1389
    %1851 = vmatpush.bf16.msra.mxu0 %v1381
    %1852 = vmatpush.bf16.msra.mxu0 %v1373
    %1853 = vmatmul.bf16.gmra.mxu0 %v136
    %v1854 = vpop.f32.mrf.mxu0
    %v1855 = vadd.f32 %v1841, %v1854
    %v1856 = vpop.f32.mrf.mxu0
    %v1857 = vadd.f32 %v1843, %v1856
    %1858 = vdwg.mxu0
    %1859 = vmatpush.bf16.msra.mxu0 %v1238
    %1860 = vmatpush.bf16.msra.mxu0 %v1230
    %1861 = vmatpush.bf16.msra.mxu0 %v1222
    %1862 = vmatpush.bf16.msra.mxu0 %v1214
    %1863 = vmatpush.bf16.msra.mxu0 %v1206
    %1864 = vmatpush.bf16.msra.mxu0 %v1198
    %1865 = vmatpush.bf16.msra.mxu0 %v1190
    %1866 = vmatpush.bf16.msra.mxu0 %v1182
    %1867 = vmatmul.bf16.gmra.mxu0 %v133
    %v1868 = vpop.f32.mrf.mxu0
    %v1869 = vadd.f32 %v398, %v1868
    %v1870 = vpop.f32.mrf.mxu0
    %v1871 = vadd.f32 %v398, %v1870
    %1872 = vdwg.mxu0
    %1873 = vmatpush.bf16.msra.mxu0 %v1302
    %1874 = vmatpush.bf16.msra.mxu0 %v1294
    %1875 = vmatpush.bf16.msra.mxu0 %v1286
    %1876 = vmatpush.bf16.msra.mxu0 %v1278
    %1877 = vmatpush.bf16.msra.mxu0 %v1270
    %1878 = vmatpush.bf16.msra.mxu0 %v1262
    %1879 = vmatpush.bf16.msra.mxu0 %v1254
    %1880 = vmatpush.bf16.msra.mxu0 %v1246
    %1881 = vmatmul.bf16.gmra.mxu0 %v134
    %v1882 = vpop.f32.mrf.mxu0
    %v1883 = vadd.f32 %v1869, %v1882
    %v1884 = vpop.f32.mrf.mxu0
    %v1885 = vadd.f32 %v1871, %v1884
    %1886 = vdwg.mxu0
    %1887 = vmatpush.bf16.msra.mxu0 %v1366
    %1888 = vmatpush.bf16.msra.mxu0 %v1358
    %1889 = vmatpush.bf16.msra.mxu0 %v1350
    %1890 = vmatpush.bf16.msra.mxu0 %v1342
    %1891 = vmatpush.bf16.msra.mxu0 %v1334
    %1892 = vmatpush.bf16.msra.mxu0 %v1326
    %1893 = vmatpush.bf16.msra.mxu0 %v1318
    %1894 = vmatpush.bf16.msra.mxu0 %v1310
    %1895 = vmatmul.bf16.gmra.mxu0 %v135
    %v1896 = vpop.f32.mrf.mxu0
    %v1897 = vadd.f32 %v1883, %v1896
    %v1898 = vpop.f32.mrf.mxu0
    %v1899 = vadd.f32 %v1885, %v1898
    %1900 = vdwg.mxu0
    %1901 = vmatpush.bf16.msra.mxu0 %v1430
    %1902 = vmatpush.bf16.msra.mxu0 %v1422
    %1903 = vmatpush.bf16.msra.mxu0 %v1414
    %1904 = vmatpush.bf16.msra.mxu0 %v1406
    %1905 = vmatpush.bf16.msra.mxu0 %v1398
    %1906 = vmatpush.bf16.msra.mxu0 %v1390
    %1907 = vmatpush.bf16.msra.mxu0 %v1382
    %1908 = vmatpush.bf16.msra.mxu0 %v1374
    %1909 = vmatmul.bf16.gmra.mxu0 %v136
    %v1910 = vpop.f32.mrf.mxu0
    %v1911 = vadd.f32 %v1897, %v1910
    %v1912 = vpop.f32.mrf.mxu0
    %v1913 = vadd.f32 %v1899, %v1912
    %1914 = vdwg.mxu0
    %1915 = vmatpush.bf16.msra.mxu0 %v1239
    %1916 = vmatpush.bf16.msra.mxu0 %v1231
    %1917 = vmatpush.bf16.msra.mxu0 %v1223
    %1918 = vmatpush.bf16.msra.mxu0 %v1215
    %1919 = vmatpush.bf16.msra.mxu0 %v1207
    %1920 = vmatpush.bf16.msra.mxu0 %v1199
    %1921 = vmatpush.bf16.msra.mxu0 %v1191
    %1922 = vmatpush.bf16.msra.mxu0 %v1183
    %1923 = vmatmul.bf16.gmra.mxu0 %v133
    %v1924 = vpop.f32.mrf.mxu0
    %v1925 = vadd.f32 %v399, %v1924
    %v1926 = vpop.f32.mrf.mxu0
    %v1927 = vadd.f32 %v399, %v1926
    %1928 = vdwg.mxu0
    %1929 = vmatpush.bf16.msra.mxu0 %v1303
    %1930 = vmatpush.bf16.msra.mxu0 %v1295
    %1931 = vmatpush.bf16.msra.mxu0 %v1287
    %1932 = vmatpush.bf16.msra.mxu0 %v1279
    %1933 = vmatpush.bf16.msra.mxu0 %v1271
    %1934 = vmatpush.bf16.msra.mxu0 %v1263
    %1935 = vmatpush.bf16.msra.mxu0 %v1255
    %1936 = vmatpush.bf16.msra.mxu0 %v1247
    %1937 = vmatmul.bf16.gmra.mxu0 %v134
    %v1938 = vpop.f32.mrf.mxu0
    %v1939 = vadd.f32 %v1925, %v1938
    %v1940 = vpop.f32.mrf.mxu0
    %v1941 = vadd.f32 %v1927, %v1940
    %1942 = vdwg.mxu0
    %1943 = vmatpush.bf16.msra.mxu0 %v1367
    %1944 = vmatpush.bf16.msra.mxu0 %v1359
    %1945 = vmatpush.bf16.msra.mxu0 %v1351
    %1946 = vmatpush.bf16.msra.mxu0 %v1343
    %1947 = vmatpush.bf16.msra.mxu0 %v1335
    %1948 = vmatpush.bf16.msra.mxu0 %v1327
    %1949 = vmatpush.bf16.msra.mxu0 %v1319
    %1950 = vmatpush.bf16.msra.mxu0 %v1311
    %1951 = vmatmul.bf16.gmra.mxu0 %v135
    %v1952 = vpop.f32.mrf.mxu0
    %v1953 = vadd.f32 %v1939, %v1952
    %v1954 = vpop.f32.mrf.mxu0
    %v1955 = vadd.f32 %v1941, %v1954
    %1956 = vdwg.mxu0
    %1957 = vmatpush.bf16.msra.mxu0 %v1431
    %1958 = vmatpush.bf16.msra.mxu0 %v1423
    %1959 = vmatpush.bf16.msra.mxu0 %v1415
    %1960 = vmatpush.bf16.msra.mxu0 %v1407
    %1961 = vmatpush.bf16.msra.mxu0 %v1399
    %1962 = vmatpush.bf16.msra.mxu0 %v1391
    %1963 = vmatpush.bf16.msra.mxu0 %v1383
    %1964 = vmatpush.bf16.msra.mxu0 %v1375
    %1965 = vmatmul.bf16.gmra.mxu0 %v136
    %v1966 = vpop.f32.mrf.mxu0
    %v1967 = vadd.f32 %v1953, %v1966
    %v1968 = vpop.f32.mrf.mxu0
    %v1969 = vadd.f32 %v1955, %v1968
    %1970 = vdwg.mxu0
    %1971 = vmatpush.bf16.msra.mxu0 %v1240
    %1972 = vmatpush.bf16.msra.mxu0 %v1232
    %1973 = vmatpush.bf16.msra.mxu0 %v1224
    %1974 = vmatpush.bf16.msra.mxu0 %v1216
    %1975 = vmatpush.bf16.msra.mxu0 %v1208
    %1976 = vmatpush.bf16.msra.mxu0 %v1200
    %1977 = vmatpush.bf16.msra.mxu0 %v1192
    %1978 = vmatpush.bf16.msra.mxu0 %v1184
    %1979 = vmatmul.bf16.gmra.mxu0 %v133
    %v1980 = vpop.f32.mrf.mxu0
    %v1981 = vadd.f32 %v400, %v1980
    %v1982 = vpop.f32.mrf.mxu0
    %v1983 = vadd.f32 %v400, %v1982
    %1984 = vdwg.mxu0
    %1985 = vmatpush.bf16.msra.mxu0 %v1304
    %1986 = vmatpush.bf16.msra.mxu0 %v1296
    %1987 = vmatpush.bf16.msra.mxu0 %v1288
    %1988 = vmatpush.bf16.msra.mxu0 %v1280
    %1989 = vmatpush.bf16.msra.mxu0 %v1272
    %1990 = vmatpush.bf16.msra.mxu0 %v1264
    %1991 = vmatpush.bf16.msra.mxu0 %v1256
    %1992 = vmatpush.bf16.msra.mxu0 %v1248
    %1993 = vmatmul.bf16.gmra.mxu0 %v134
    %v1994 = vpop.f32.mrf.mxu0
    %v1995 = vadd.f32 %v1981, %v1994
    %v1996 = vpop.f32.mrf.mxu0
    %v1997 = vadd.f32 %v1983, %v1996
    %1998 = vdwg.mxu0
    %1999 = vmatpush.bf16.msra.mxu0 %v1368
    %2000 = vmatpush.bf16.msra.mxu0 %v1360
    %2001 = vmatpush.bf16.msra.mxu0 %v1352
    %2002 = vmatpush.bf16.msra.mxu0 %v1344
    %2003 = vmatpush.bf16.msra.mxu0 %v1336
    %2004 = vmatpush.bf16.msra.mxu0 %v1328
    %2005 = vmatpush.bf16.msra.mxu0 %v1320
    %2006 = vmatpush.bf16.msra.mxu0 %v1312
    %2007 = vmatmul.bf16.gmra.mxu0 %v135
    %v2008 = vpop.f32.mrf.mxu0
    %v2009 = vadd.f32 %v1995, %v2008
    %v2010 = vpop.f32.mrf.mxu0
    %v2011 = vadd.f32 %v1997, %v2010
    %2012 = vdwg.mxu0
    %2013 = vmatpush.bf16.msra.mxu0 %v1432
    %2014 = vmatpush.bf16.msra.mxu0 %v1424
    %2015 = vmatpush.bf16.msra.mxu0 %v1416
    %2016 = vmatpush.bf16.msra.mxu0 %v1408
    %2017 = vmatpush.bf16.msra.mxu0 %v1400
    %2018 = vmatpush.bf16.msra.mxu0 %v1392
    %2019 = vmatpush.bf16.msra.mxu0 %v1384
    %2020 = vmatpush.bf16.msra.mxu0 %v1376
    %2021 = vmatmul.bf16.gmra.mxu0 %v136
    %v2022 = vpop.f32.mrf.mxu0
    %v2023 = vadd.f32 %v2009, %v2022
    %v2024 = vpop.f32.mrf.mxu0
    %v2025 = vadd.f32 %v2011, %v2024
    %2026 = vdwg.mxu0
    %2027 = vmatpush.bf16.msra.mxu0 %v1241
    %2028 = vmatpush.bf16.msra.mxu0 %v1233
    %2029 = vmatpush.bf16.msra.mxu0 %v1225
    %2030 = vmatpush.bf16.msra.mxu0 %v1217
    %2031 = vmatpush.bf16.msra.mxu0 %v1209
    %2032 = vmatpush.bf16.msra.mxu0 %v1201
    %2033 = vmatpush.bf16.msra.mxu0 %v1193
    %2034 = vmatpush.bf16.msra.mxu0 %v1185
    %2035 = vmatmul.bf16.gmra.mxu0 %v133
    %v2036 = vpop.f32.mrf.mxu0
    %v2037 = vadd.f32 %v401, %v2036
    %v2038 = vpop.f32.mrf.mxu0
    %v2039 = vadd.f32 %v401, %v2038
    %2040 = vdwg.mxu0
    %2041 = vmatpush.bf16.msra.mxu0 %v1305
    %2042 = vmatpush.bf16.msra.mxu0 %v1297
    %2043 = vmatpush.bf16.msra.mxu0 %v1289
    %2044 = vmatpush.bf16.msra.mxu0 %v1281
    %2045 = vmatpush.bf16.msra.mxu0 %v1273
    %2046 = vmatpush.bf16.msra.mxu0 %v1265
    %2047 = vmatpush.bf16.msra.mxu0 %v1257
    %2048 = vmatpush.bf16.msra.mxu0 %v1249
    %2049 = vmatmul.bf16.gmra.mxu0 %v134
    %v2050 = vpop.f32.mrf.mxu0
    %v2051 = vadd.f32 %v2037, %v2050
    %v2052 = vpop.f32.mrf.mxu0
    %v2053 = vadd.f32 %v2039, %v2052
    %2054 = vdwg.mxu0
    %2055 = vmatpush.bf16.msra.mxu0 %v1369
    %2056 = vmatpush.bf16.msra.mxu0 %v1361
    %2057 = vmatpush.bf16.msra.mxu0 %v1353
    %2058 = vmatpush.bf16.msra.mxu0 %v1345
    %2059 = vmatpush.bf16.msra.mxu0 %v1337
    %2060 = vmatpush.bf16.msra.mxu0 %v1329
    %2061 = vmatpush.bf16.msra.mxu0 %v1321
    %2062 = vmatpush.bf16.msra.mxu0 %v1313
    %2063 = vmatmul.bf16.gmra.mxu0 %v135
    %v2064 = vpop.f32.mrf.mxu0
    %v2065 = vadd.f32 %v2051, %v2064
    %v2066 = vpop.f32.mrf.mxu0
    %v2067 = vadd.f32 %v2053, %v2066
    %2068 = vdwg.mxu0
    %2069 = vmatpush.bf16.msra.mxu0 %v1433
    %2070 = vmatpush.bf16.msra.mxu0 %v1425
    %2071 = vmatpush.bf16.msra.mxu0 %v1417
    %2072 = vmatpush.bf16.msra.mxu0 %v1409
    %2073 = vmatpush.bf16.msra.mxu0 %v1401
    %2074 = vmatpush.bf16.msra.mxu0 %v1393
    %2075 = vmatpush.bf16.msra.mxu0 %v1385
    %2076 = vmatpush.bf16.msra.mxu0 %v1377
    %2077 = vmatmul.bf16.gmra.mxu0 %v136
    %v2078 = vpop.f32.mrf.mxu0
    %v2079 = vadd.f32 %v2065, %v2078
    %v2080 = vpop.f32.mrf.mxu0
    %v2081 = vadd.f32 %v2067, %v2080
    %2082 = vdwg.mxu0
    %2083 = vmatpush.bf16.msra.mxu0 %v1242
    %2084 = vmatpush.bf16.msra.mxu0 %v1234
    %2085 = vmatpush.bf16.msra.mxu0 %v1226
    %2086 = vmatpush.bf16.msra.mxu0 %v1218
    %2087 = vmatpush.bf16.msra.mxu0 %v1210
    %2088 = vmatpush.bf16.msra.mxu0 %v1202
    %2089 = vmatpush.bf16.msra.mxu0 %v1194
    %2090 = vmatpush.bf16.msra.mxu0 %v1186
    %2091 = vmatmul.bf16.gmra.mxu0 %v133
    %v2092 = vpop.f32.mrf.mxu0
    %v2093 = vadd.f32 %v402, %v2092
    %v2094 = vpop.f32.mrf.mxu0
    %v2095 = vadd.f32 %v402, %v2094
    %2096 = vdwg.mxu0
    %2097 = vmatpush.bf16.msra.mxu0 %v1306
    %2098 = vmatpush.bf16.msra.mxu0 %v1298
    %2099 = vmatpush.bf16.msra.mxu0 %v1290
    %2100 = vmatpush.bf16.msra.mxu0 %v1282
    %2101 = vmatpush.bf16.msra.mxu0 %v1274
    %2102 = vmatpush.bf16.msra.mxu0 %v1266
    %2103 = vmatpush.bf16.msra.mxu0 %v1258
    %2104 = vmatpush.bf16.msra.mxu0 %v1250
    %2105 = vmatmul.bf16.gmra.mxu0 %v134
    %v2106 = vpop.f32.mrf.mxu0
    %v2107 = vadd.f32 %v2093, %v2106
    %v2108 = vpop.f32.mrf.mxu0
    %v2109 = vadd.f32 %v2095, %v2108
    %2110 = vdwg.mxu0
    %2111 = vmatpush.bf16.msra.mxu0 %v1370
    %2112 = vmatpush.bf16.msra.mxu0 %v1362
    %2113 = vmatpush.bf16.msra.mxu0 %v1354
    %2114 = vmatpush.bf16.msra.mxu0 %v1346
    %2115 = vmatpush.bf16.msra.mxu0 %v1338
    %2116 = vmatpush.bf16.msra.mxu0 %v1330
    %2117 = vmatpush.bf16.msra.mxu0 %v1322
    %2118 = vmatpush.bf16.msra.mxu0 %v1314
    %2119 = vmatmul.bf16.gmra.mxu0 %v135
    %v2120 = vpop.f32.mrf.mxu0
    %v2121 = vadd.f32 %v2107, %v2120
    %v2122 = vpop.f32.mrf.mxu0
    %v2123 = vadd.f32 %v2109, %v2122
    %2124 = vdwg.mxu0
    %2125 = vmatpush.bf16.msra.mxu0 %v1434
    %2126 = vmatpush.bf16.msra.mxu0 %v1426
    %2127 = vmatpush.bf16.msra.mxu0 %v1418
    %2128 = vmatpush.bf16.msra.mxu0 %v1410
    %2129 = vmatpush.bf16.msra.mxu0 %v1402
    %2130 = vmatpush.bf16.msra.mxu0 %v1394
    %2131 = vmatpush.bf16.msra.mxu0 %v1386
    %2132 = vmatpush.bf16.msra.mxu0 %v1378
    %2133 = vmatmul.bf16.gmra.mxu0 %v136
    %v2134 = vpop.f32.mrf.mxu0
    %v2135 = vadd.f32 %v2121, %v2134
    %v2136 = vpop.f32.mrf.mxu0
    %v2137 = vadd.f32 %v2123, %v2136
    %2138 = vdwg.mxu0
    %v2139 = vmul.f32 %v1743, 0.2
    %v2140 = vmul.f32 %v1799, 0.2
    %v2141 = vmul.f32 %v1855, 0.2
    %v2142 = vmul.f32 %v1911, 0.2
    %v2143 = vmul.f32 %v1967, 0.2
    %v2144 = vmul.f32 %v2023, 0.2
    %v2145 = vmul.f32 %v2079, 0.2
    %v2146 = vmul.f32 %v2135, 0.2
    %v2147 = vmul.f32 %v1745, 0.2
    %v2148 = vmul.f32 %v1801, 0.2
    %v2149 = vmul.f32 %v1857, 0.2
    %v2150 = vmul.f32 %v1913, 0.2
    %v2151 = vmul.f32 %v1969, 0.2
    %v2152 = vmul.f32 %v2025, 0.2
    %v2153 = vmul.f32 %v2081, 0.2
    %v2154 = vmul.f32 %v2137, 0.2
    %v2155 = vmax.f32 %v1743, %v2139
    %v2156 = vmax.f32 %v1799, %v2140
    %v2157 = vmax.f32 %v1855, %v2141
    %v2158 = vmax.f32 %v1911, %v2142
    %v2159 = vmax.f32 %v1967, %v2143
    %v2160 = vmax.f32 %v2023, %v2144
    %v2161 = vmax.f32 %v2079, %v2145
    %v2162 = vmax.f32 %v2135, %v2146
    %v2163 = vmax.f32 %v1745, %v2147
    %v2164 = vmax.f32 %v1801, %v2148
    %v2165 = vmax.f32 %v1857, %v2149
    %v2166 = vmax.f32 %v1913, %v2150
    %v2167 = vmax.f32 %v1969, %v2151
    %v2168 = vmax.f32 %v2025, %v2152
    %v2169 = vmax.f32 %v2081, %v2153
    %v2170 = vmax.f32 %v2137, %v2154
    %v2171 = vpack.c.bf16 %v2163, %v2155
    %v2172 = vpack.c.bf16 %v2164, %v2156
    %v2173 = vpack.c.bf16 %v2165, %v2157
    %v2174 = vpack.c.bf16 %v2166, %v2158
    %v2175 = vpack.c.bf16 %v2167, %v2159
    %v2176 = vpack.c.bf16 %v2168, %v2160
    %v2177 = vpack.c.bf16 %v2169, %v2161
    %v2178 = vpack.c.bf16 %v2170, %v2162
    %v2179 = vld [vmem:[#allocation8] sm:$0xff]
    %v2180 = vld [vmem:[#allocation8 + $0x8] sm:$0xff]
    %v2181 = vld [vmem:[#allocation8 + $0x10] sm:$0xff]
    %v2182 = vld [vmem:[#allocation8 + $0x18] sm:$0xff]
    %v2183 = vld [vmem:[#allocation8 + $0x20] sm:$0xff]
    %v2184 = vld [vmem:[#allocation8 + $0x28] sm:$0xff]
    %v2185 = vld [vmem:[#allocation8 + $0x30] sm:$0xff]
    %v2186 = vld [vmem:[#allocation8 + $0x38] sm:$0xff]
    %v2187 = vld [vmem:[#allocation8 + $0x40] sm:$0xff]
    %v2188 = vld [vmem:[#allocation8 + $0x48] sm:$0xff]
    %v2189 = vld [vmem:[#allocation8 + $0x50] sm:$0xff]
    %v2190 = vld [vmem:[#allocation8 + $0x58] sm:$0xff]
    %v2191 = vld [vmem:[#allocation8 + $0x60] sm:$0xff]
    %v2192 = vld [vmem:[#allocation8 + $0x68] sm:$0xff]
    %v2193 = vld [vmem:[#allocation8 + $0x70] sm:$0xff]
    %v2194 = vld [vmem:[#allocation8 + $0x78] sm:$0xff]
    %v2195 = vld [vmem:[#allocation8 + $0x80] sm:$0xff]
    %v2196 = vld [vmem:[#allocation8 + $0x88] sm:$0xff]
    %v2197 = vld [vmem:[#allocation8 + $0x90] sm:$0xff]
    %v2198 = vld [vmem:[#allocation8 + $0x98] sm:$0xff]
    %v2199 = vld [vmem:[#allocation8 + $0xa0] sm:$0xff]
    %v2200 = vld [vmem:[#allocation8 + $0xa8] sm:$0xff]
    %v2201 = vld [vmem:[#allocation8 + $0xb0] sm:$0xff]
    %v2202 = vld [vmem:[#allocation8 + $0xb8] sm:$0xff]
    %v2203 = vld [vmem:[#allocation8 + $0xc0] sm:$0xff]
    %v2204 = vld [vmem:[#allocation8 + $0xc8] sm:$0xff]
    %v2205 = vld [vmem:[#allocation8 + $0xd0] sm:$0xff]
    %v2206 = vld [vmem:[#allocation8 + $0xd8] sm:$0xff]
    %v2207 = vld [vmem:[#allocation8 + $0xe0] sm:$0xff]
    %v2208 = vld [vmem:[#allocation8 + $0xe8] sm:$0xff]
    %v2209 = vld [vmem:[#allocation8 + $0xf0] sm:$0xff]
    %v2210 = vld [vmem:[#allocation8 + $0xf8] sm:$0xff]
    %v2211 = vld [vmem:[#allocation8 + $0x100] sm:$0xff]
    %v2212 = vld [vmem:[#allocation8 + $0x108] sm:$0xff]
    %v2213 = vld [vmem:[#allocation8 + $0x110] sm:$0xff]
    %v2214 = vld [vmem:[#allocation8 + $0x118] sm:$0xff]
    %v2215 = vld [vmem:[#allocation8 + $0x120] sm:$0xff]
    %v2216 = vld [vmem:[#allocation8 + $0x128] sm:$0xff]
    %v2217 = vld [vmem:[#allocation8 + $0x130] sm:$0xff]
    %v2218 = vld [vmem:[#allocation8 + $0x138] sm:$0xff]
    %v2219 = vld [vmem:[#allocation8 + $0x140] sm:$0xff]
    %v2220 = vld [vmem:[#allocation8 + $0x148] sm:$0xff]
    %v2221 = vld [vmem:[#allocation8 + $0x150] sm:$0xff]
    %v2222 = vld [vmem:[#allocation8 + $0x158] sm:$0xff]
    %v2223 = vld [vmem:[#allocation8 + $0x160] sm:$0xff]
    %v2224 = vld [vmem:[#allocation8 + $0x168] sm:$0xff]
    %v2225 = vld [vmem:[#allocation8 + $0x170] sm:$0xff]
    %v2226 = vld [vmem:[#allocation8 + $0x178] sm:$0xff]
    %v2227 = vld [vmem:[#allocation8 + $0x180] sm:$0xff]
    %v2228 = vld [vmem:[#allocation8 + $0x188] sm:$0xff]
    %v2229 = vld [vmem:[#allocation8 + $0x190] sm:$0xff]
    %v2230 = vld [vmem:[#allocation8 + $0x198] sm:$0xff]
    %v2231 = vld [vmem:[#allocation8 + $0x1a0] sm:$0xff]
    %v2232 = vld [vmem:[#allocation8 + $0x1a8] sm:$0xff]
    %v2233 = vld [vmem:[#allocation8 + $0x1b0] sm:$0xff]
    %v2234 = vld [vmem:[#allocation8 + $0x1b8] sm:$0xff]
    %v2235 = vld [vmem:[#allocation8 + $0x1c0] sm:$0xff]
    %v2236 = vld [vmem:[#allocation8 + $0x1c8] sm:$0xff]
    %v2237 = vld [vmem:[#allocation8 + $0x1d0] sm:$0xff]
    %v2238 = vld [vmem:[#allocation8 + $0x1d8] sm:$0xff]
    %v2239 = vld [vmem:[#allocation8 + $0x1e0] sm:$0xff]
    %v2240 = vld [vmem:[#allocation8 + $0x1e8] sm:$0xff]
    %v2241 = vld [vmem:[#allocation8 + $0x1f0] sm:$0xff]
    %v2242 = vld [vmem:[#allocation8 + $0x1f8] sm:$0xff]
    %v2243 = vld [vmem:[#allocation8 + $0x200] sm:$0xff]
    %v2244 = vld [vmem:[#allocation8 + $0x208] sm:$0xff]
    %v2245 = vld [vmem:[#allocation8 + $0x210] sm:$0xff]
    %v2246 = vld [vmem:[#allocation8 + $0x218] sm:$0xff]
    %v2247 = vld [vmem:[#allocation8 + $0x220] sm:$0xff]
    %v2248 = vld [vmem:[#allocation8 + $0x228] sm:$0xff]
    %v2249 = vld [vmem:[#allocation8 + $0x230] sm:$0xff]
    %v2250 = vld [vmem:[#allocation8 + $0x238] sm:$0xff]
    %v2251 = vld [vmem:[#allocation8 + $0x240] sm:$0xff]
    %v2252 = vld [vmem:[#allocation8 + $0x248] sm:$0xff]
    %v2253 = vld [vmem:[#allocation8 + $0x250] sm:$0xff]
    %v2254 = vld [vmem:[#allocation8 + $0x258] sm:$0xff]
    %v2255 = vld [vmem:[#allocation8 + $0x260] sm:$0xff]
    %v2256 = vld [vmem:[#allocation8 + $0x268] sm:$0xff]
    %v2257 = vld [vmem:[#allocation8 + $0x270] sm:$0xff]
    %v2258 = vld [vmem:[#allocation8 + $0x278] sm:$0xff]
    %v2259 = vld [vmem:[#allocation8 + $0x280] sm:$0xff]
    %v2260 = vld [vmem:[#allocation8 + $0x288] sm:$0xff]
    %v2261 = vld [vmem:[#allocation8 + $0x290] sm:$0xff]
    %v2262 = vld [vmem:[#allocation8 + $0x298] sm:$0xff]
    %v2263 = vld [vmem:[#allocation8 + $0x2a0] sm:$0xff]
    %v2264 = vld [vmem:[#allocation8 + $0x2a8] sm:$0xff]
    %v2265 = vld [vmem:[#allocation8 + $0x2b0] sm:$0xff]
    %v2266 = vld [vmem:[#allocation8 + $0x2b8] sm:$0xff]
    %v2267 = vld [vmem:[#allocation8 + $0x2c0] sm:$0xff]
    %v2268 = vld [vmem:[#allocation8 + $0x2c8] sm:$0xff]
    %v2269 = vld [vmem:[#allocation8 + $0x2d0] sm:$0xff]
    %v2270 = vld [vmem:[#allocation8 + $0x2d8] sm:$0xff]
    %v2271 = vld [vmem:[#allocation8 + $0x2e0] sm:$0xff]
    %v2272 = vld [vmem:[#allocation8 + $0x2e8] sm:$0xff]
    %v2273 = vld [vmem:[#allocation8 + $0x2f0] sm:$0xff]
    %v2274 = vld [vmem:[#allocation8 + $0x2f8] sm:$0xff]
    %v2275 = vld [vmem:[#allocation8 + $0x300] sm:$0xff]
    %v2276 = vld [vmem:[#allocation8 + $0x308] sm:$0xff]
    %v2277 = vld [vmem:[#allocation8 + $0x310] sm:$0xff]
    %v2278 = vld [vmem:[#allocation8 + $0x318] sm:$0xff]
    %v2279 = vld [vmem:[#allocation8 + $0x320] sm:$0xff]
    %v2280 = vld [vmem:[#allocation8 + $0x328] sm:$0xff]
    %v2281 = vld [vmem:[#allocation8 + $0x330] sm:$0xff]
    %v2282 = vld [vmem:[#allocation8 + $0x338] sm:$0xff]
    %v2283 = vld [vmem:[#allocation8 + $0x340] sm:$0xff]
    %v2284 = vld [vmem:[#allocation8 + $0x348] sm:$0xff]
    %v2285 = vld [vmem:[#allocation8 + $0x350] sm:$0xff]
    %v2286 = vld [vmem:[#allocation8 + $0x358] sm:$0xff]
    %v2287 = vld [vmem:[#allocation8 + $0x360] sm:$0xff]
    %v2288 = vld [vmem:[#allocation8 + $0x368] sm:$0xff]
    %v2289 = vld [vmem:[#allocation8 + $0x370] sm:$0xff]
    %v2290 = vld [vmem:[#allocation8 + $0x378] sm:$0xff]
    %v2291 = vld [vmem:[#allocation8 + $0x380] sm:$0xff]
    %v2292 = vld [vmem:[#allocation8 + $0x388] sm:$0xff]
    %v2293 = vld [vmem:[#allocation8 + $0x390] sm:$0xff]
    %v2294 = vld [vmem:[#allocation8 + $0x398] sm:$0xff]
    %v2295 = vld [vmem:[#allocation8 + $0x3a0] sm:$0xff]
    %v2296 = vld [vmem:[#allocation8 + $0x3a8] sm:$0xff]
    %v2297 = vld [vmem:[#allocation8 + $0x3b0] sm:$0xff]
    %v2298 = vld [vmem:[#allocation8 + $0x3b8] sm:$0xff]
    %v2299 = vld [vmem:[#allocation8 + $0x3c0] sm:$0xff]
    %v2300 = vld [vmem:[#allocation8 + $0x3c8] sm:$0xff]
    %v2301 = vld [vmem:[#allocation8 + $0x3d0] sm:$0xff]
    %v2302 = vld [vmem:[#allocation8 + $0x3d8] sm:$0xff]
    %v2303 = vld [vmem:[#allocation8 + $0x3e0] sm:$0xff]
    %v2304 = vld [vmem:[#allocation8 + $0x3e8] sm:$0xff]
    %v2305 = vld [vmem:[#allocation8 + $0x3f0] sm:$0xff]
    %v2306 = vld [vmem:[#allocation8 + $0x3f8] sm:$0xff]
    %v2307 = vld [vmem:[%s4] sm:$0x3]
    %v2309 = vperm.slane %v2307, 0
    %v2310 = vperm.slane %v2307, 1
    %v2441 = vunpack.c.l.b16 %v2179
    %v2442 = vunpack.c.h.b16 %v2179
    %v2443 = vunpack.c.l.b16 %v2180
    %v2444 = vunpack.c.h.b16 %v2180
    %v2445 = vunpack.c.l.b16 %v2181
    %v2446 = vunpack.c.h.b16 %v2181
    %v2447 = vunpack.c.l.b16 %v2182
    %v2448 = vunpack.c.h.b16 %v2182
    %v2449 = vunpack.c.l.b16 %v2183
    %v2450 = vunpack.c.h.b16 %v2183
    %v2451 = vunpack.c.l.b16 %v2184
    %v2452 = vunpack.c.h.b16 %v2184
    %v2453 = vunpack.c.l.b16 %v2185
    %v2454 = vunpack.c.h.b16 %v2185
    %v2455 = vunpack.c.l.b16 %v2186
    %v2456 = vunpack.c.h.b16 %v2186
    %v2457 = vunpack.c.l.b16 %v2187
    %v2458 = vunpack.c.h.b16 %v2187
    %v2459 = vunpack.c.l.b16 %v2188
    %v2460 = vunpack.c.h.b16 %v2188
    %v2461 = vunpack.c.l.b16 %v2189
    %v2462 = vunpack.c.h.b16 %v2189
    %v2463 = vunpack.c.l.b16 %v2190
    %v2464 = vunpack.c.h.b16 %v2190
    %v2465 = vunpack.c.l.b16 %v2191
    %v2466 = vunpack.c.h.b16 %v2191
    %v2467 = vunpack.c.l.b16 %v2192
    %v2468 = vunpack.c.h.b16 %v2192
    %v2469 = vunpack.c.l.b16 %v2193
    %v2470 = vunpack.c.h.b16 %v2193
    %v2471 = vunpack.c.l.b16 %v2194
    %v2472 = vunpack.c.h.b16 %v2194
    %v2473 = vunpack.c.l.b16 %v2195
    %v2474 = vunpack.c.h.b16 %v2195
    %v2475 = vunpack.c.l.b16 %v2196
    %v2476 = vunpack.c.h.b16 %v2196
    %v2477 = vunpack.c.l.b16 %v2197
    %v2478 = vunpack.c.h.b16 %v2197
    %v2479 = vunpack.c.l.b16 %v2198
    %v2480 = vunpack.c.h.b16 %v2198
    %v2481 = vunpack.c.l.b16 %v2199
    %v2482 = vunpack.c.h.b16 %v2199
    %v2483 = vunpack.c.l.b16 %v2200
    %v2484 = vunpack.c.h.b16 %v2200
    %v2485 = vunpack.c.l.b16 %v2201
    %v2486 = vunpack.c.h.b16 %v2201
    %v2487 = vunpack.c.l.b16 %v2202
    %v2488 = vunpack.c.h.b16 %v2202
    %v2489 = vunpack.c.l.b16 %v2203
    %v2490 = vunpack.c.h.b16 %v2203
    %v2491 = vunpack.c.l.b16 %v2204
    %v2492 = vunpack.c.h.b16 %v2204
    %v2493 = vunpack.c.l.b16 %v2205
    %v2494 = vunpack.c.h.b16 %v2205
    %v2495 = vunpack.c.l.b16 %v2206
    %v2496 = vunpack.c.h.b16 %v2206
    %v2497 = vunpack.c.l.b16 %v2207
    %v2498 = vunpack.c.h.b16 %v2207
    %v2499 = vunpack.c.l.b16 %v2208
    %v2500 = vunpack.c.h.b16 %v2208
    %v2501 = vunpack.c.l.b16 %v2209
    %v2502 = vunpack.c.h.b16 %v2209
    %v2503 = vunpack.c.l.b16 %v2210
    %v2504 = vunpack.c.h.b16 %v2210
    %v2505 = vunpack.c.l.b16 %v2211
    %v2506 = vunpack.c.h.b16 %v2211
    %v2507 = vunpack.c.l.b16 %v2212
    %v2508 = vunpack.c.h.b16 %v2212
    %v2509 = vunpack.c.l.b16 %v2213
    %v2510 = vunpack.c.h.b16 %v2213
    %v2511 = vunpack.c.l.b16 %v2214
    %v2512 = vunpack.c.h.b16 %v2214
    %v2513 = vunpack.c.l.b16 %v2215
    %v2514 = vunpack.c.h.b16 %v2215
    %v2515 = vunpack.c.l.b16 %v2216
    %v2516 = vunpack.c.h.b16 %v2216
    %v2517 = vunpack.c.l.b16 %v2217
    %v2518 = vunpack.c.h.b16 %v2217
    %v2519 = vunpack.c.l.b16 %v2218
    %v2520 = vunpack.c.h.b16 %v2218
    %v2521 = vunpack.c.l.b16 %v2219
    %v2522 = vunpack.c.h.b16 %v2219
    %v2523 = vunpack.c.l.b16 %v2220
    %v2524 = vunpack.c.h.b16 %v2220
    %v2525 = vunpack.c.l.b16 %v2221
    %v2526 = vunpack.c.h.b16 %v2221
    %v2527 = vunpack.c.l.b16 %v2222
    %v2528 = vunpack.c.h.b16 %v2222
    %v2529 = vunpack.c.l.b16 %v2223
    %v2530 = vunpack.c.h.b16 %v2223
    %v2531 = vunpack.c.l.b16 %v2224
    %v2532 = vunpack.c.h.b16 %v2224
    %v2533 = vunpack.c.l.b16 %v2225
    %v2534 = vunpack.c.h.b16 %v2225
    %v2535 = vunpack.c.l.b16 %v2226
    %v2536 = vunpack.c.h.b16 %v2226
    %v2537 = vunpack.c.l.b16 %v2227
    %v2538 = vunpack.c.h.b16 %v2227
    %v2539 = vunpack.c.l.b16 %v2228
    %v2540 = vunpack.c.h.b16 %v2228
    %v2541 = vunpack.c.l.b16 %v2229
    %v2542 = vunpack.c.h.b16 %v2229
    %v2543 = vunpack.c.l.b16 %v2230
    %v2544 = vunpack.c.h.b16 %v2230
    %v2545 = vunpack.c.l.b16 %v2231
    %v2546 = vunpack.c.h.b16 %v2231
    %v2547 = vunpack.c.l.b16 %v2232
    %v2548 = vunpack.c.h.b16 %v2232
    %v2549 = vunpack.c.l.b16 %v2233
    %v2550 = vunpack.c.h.b16 %v2233
    %v2551 = vunpack.c.l.b16 %v2234
    %v2552 = vunpack.c.h.b16 %v2234
    %v2553 = vunpack.c.l.b16 %v2235
    %v2554 = vunpack.c.h.b16 %v2235
    %v2555 = vunpack.c.l.b16 %v2236
    %v2556 = vunpack.c.h.b16 %v2236
    %v2557 = vunpack.c.l.b16 %v2237
    %v2558 = vunpack.c.h.b16 %v2237
    %v2559 = vunpack.c.l.b16 %v2238
    %v2560 = vunpack.c.h.b16 %v2238
    %v2561 = vunpack.c.l.b16 %v2239
    %v2562 = vunpack.c.h.b16 %v2239
    %v2563 = vunpack.c.l.b16 %v2240
    %v2564 = vunpack.c.h.b16 %v2240
    %v2565 = vunpack.c.l.b16 %v2241
    %v2566 = vunpack.c.h.b16 %v2241
    %v2567 = vunpack.c.l.b16 %v2242
    %v2568 = vunpack.c.h.b16 %v2242
    %v2569 = vunpack.c.l.b16 %v2243
    %v2570 = vunpack.c.h.b16 %v2243
    %v2571 = vunpack.c.l.b16 %v2244
    %v2572 = vunpack.c.h.b16 %v2244
    %v2573 = vunpack.c.l.b16 %v2245
    %v2574 = vunpack.c.h.b16 %v2245
    %v2575 = vunpack.c.l.b16 %v2246
    %v2576 = vunpack.c.h.b16 %v2246
    %v2577 = vunpack.c.l.b16 %v2247
    %v2578 = vunpack.c.h.b16 %v2247
    %v2579 = vunpack.c.l.b16 %v2248
    %v2580 = vunpack.c.h.b16 %v2248
    %v2581 = vunpack.c.l.b16 %v2249
    %v2582 = vunpack.c.h.b16 %v2249
    %v2583 = vunpack.c.l.b16 %v2250
    %v2584 = vunpack.c.h.b16 %v2250
    %v2585 = vunpack.c.l.b16 %v2251
    %v2586 = vunpack.c.h.b16 %v2251
    %v2587 = vunpack.c.l.b16 %v2252
    %v2588 = vunpack.c.h.b16 %v2252
    %v2589 = vunpack.c.l.b16 %v2253
    %v2590 = vunpack.c.h.b16 %v2253
    %v2591 = vunpack.c.l.b16 %v2254
    %v2592 = vunpack.c.h.b16 %v2254
    %v2593 = vunpack.c.l.b16 %v2255
    %v2594 = vunpack.c.h.b16 %v2255
    %v2595 = vunpack.c.l.b16 %v2256
    %v2596 = vunpack.c.h.b16 %v2256
    %v2597 = vunpack.c.l.b16 %v2257
    %v2598 = vunpack.c.h.b16 %v2257
    %v2599 = vunpack.c.l.b16 %v2258
    %v2600 = vunpack.c.h.b16 %v2258
    %v2601 = vunpack.c.l.b16 %v2259
    %v2602 = vunpack.c.h.b16 %v2259
    %v2603 = vunpack.c.l.b16 %v2260
    %v2604 = vunpack.c.h.b16 %v2260
    %v2605 = vunpack.c.l.b16 %v2261
    %v2606 = vunpack.c.h.b16 %v2261
    %v2607 = vunpack.c.l.b16 %v2262
    %v2608 = vunpack.c.h.b16 %v2262
    %v2609 = vunpack.c.l.b16 %v2263
    %v2610 = vunpack.c.h.b16 %v2263
    %v2611 = vunpack.c.l.b16 %v2264
    %v2612 = vunpack.c.h.b16 %v2264
    %v2613 = vunpack.c.l.b16 %v2265
    %v2614 = vunpack.c.h.b16 %v2265
    %v2615 = vunpack.c.l.b16 %v2266
    %v2616 = vunpack.c.h.b16 %v2266
    %v2617 = vunpack.c.l.b16 %v2267
    %v2618 = vunpack.c.h.b16 %v2267
    %v2619 = vunpack.c.l.b16 %v2268
    %v2620 = vunpack.c.h.b16 %v2268
    %v2621 = vunpack.c.l.b16 %v2269
    %v2622 = vunpack.c.h.b16 %v2269
    %v2623 = vunpack.c.l.b16 %v2270
    %v2624 = vunpack.c.h.b16 %v2270
    %v2625 = vunpack.c.l.b16 %v2271
    %v2626 = vunpack.c.h.b16 %v2271
    %v2627 = vunpack.c.l.b16 %v2272
    %v2628 = vunpack.c.h.b16 %v2272
    %v2629 = vunpack.c.l.b16 %v2273
    %v2630 = vunpack.c.h.b16 %v2273
    %v2631 = vunpack.c.l.b16 %v2274
    %v2632 = vunpack.c.h.b16 %v2274
    %v2633 = vunpack.c.l.b16 %v2275
    %v2634 = vunpack.c.h.b16 %v2275
    %v2635 = vunpack.c.l.b16 %v2276
    %v2636 = vunpack.c.h.b16 %v2276
    %v2637 = vunpack.c.l.b16 %v2277
    %v2638 = vunpack.c.h.b16 %v2277
    %v2639 = vunpack.c.l.b16 %v2278
    %v2640 = vunpack.c.h.b16 %v2278
    %v2641 = vunpack.c.l.b16 %v2279
    %v2642 = vunpack.c.h.b16 %v2279
    %v2643 = vunpack.c.l.b16 %v2280
    %v2644 = vunpack.c.h.b16 %v2280
    %v2645 = vunpack.c.l.b16 %v2281
    %v2646 = vunpack.c.h.b16 %v2281
    %v2647 = vunpack.c.l.b16 %v2282
    %v2648 = vunpack.c.h.b16 %v2282
    %v2649 = vunpack.c.l.b16 %v2283
    %v2650 = vunpack.c.h.b16 %v2283
    %v2651 = vunpack.c.l.b16 %v2284
    %v2652 = vunpack.c.h.b16 %v2284
    %v2653 = vunpack.c.l.b16 %v2285
    %v2654 = vunpack.c.h.b16 %v2285
    %v2655 = vunpack.c.l.b16 %v2286
    %v2656 = vunpack.c.h.b16 %v2286
    %v2657 = vunpack.c.l.b16 %v2287
    %v2658 = vunpack.c.h.b16 %v2287
    %v2659 = vunpack.c.l.b16 %v2288
    %v2660 = vunpack.c.h.b16 %v2288
    %v2661 = vunpack.c.l.b16 %v2289
    %v2662 = vunpack.c.h.b16 %v2289
    %v2663 = vunpack.c.l.b16 %v2290
    %v2664 = vunpack.c.h.b16 %v2290
    %v2665 = vunpack.c.l.b16 %v2291
    %v2666 = vunpack.c.h.b16 %v2291
    %v2667 = vunpack.c.l.b16 %v2292
    %v2668 = vunpack.c.h.b16 %v2292
    %v2669 = vunpack.c.l.b16 %v2293
    %v2670 = vunpack.c.h.b16 %v2293
    %v2671 = vunpack.c.l.b16 %v2294
    %v2672 = vunpack.c.h.b16 %v2294
    %v2673 = vunpack.c.l.b16 %v2295
    %v2674 = vunpack.c.h.b16 %v2295
    %v2675 = vunpack.c.l.b16 %v2296
    %v2676 = vunpack.c.h.b16 %v2296
    %v2677 = vunpack.c.l.b16 %v2297
    %v2678 = vunpack.c.h.b16 %v2297
    %v2679 = vunpack.c.l.b16 %v2298
    %v2680 = vunpack.c.h.b16 %v2298
    %v2681 = vunpack.c.l.b16 %v2299
    %v2682 = vunpack.c.h.b16 %v2299
    %v2683 = vunpack.c.l.b16 %v2300
    %v2684 = vunpack.c.h.b16 %v2300
    %v2685 = vunpack.c.l.b16 %v2301
    %v2686 = vunpack.c.h.b16 %v2301
    %v2687 = vunpack.c.l.b16 %v2302
    %v2688 = vunpack.c.h.b16 %v2302
    %v2689 = vunpack.c.l.b16 %v2303
    %v2690 = vunpack.c.h.b16 %v2303
    %v2691 = vunpack.c.l.b16 %v2304
    %v2692 = vunpack.c.h.b16 %v2304
    %v2693 = vunpack.c.l.b16 %v2305
    %v2694 = vunpack.c.h.b16 %v2305
    %v2695 = vunpack.c.l.b16 %v2306
    %v2696 = vunpack.c.h.b16 %v2306
    %v2697 = vpack.c.b16 %v2443, %v2441
    %v2698 = vpack.c.b16 %v2444, %v2442
    %v2699 = vpack.c.b16 %v2447, %v2445
    %v2700 = vpack.c.b16 %v2448, %v2446
    %v2701 = vpack.c.b16 %v2451, %v2449
    %v2702 = vpack.c.b16 %v2452, %v2450
    %v2703 = vpack.c.b16 %v2455, %v2453
    %v2704 = vpack.c.b16 %v2456, %v2454
    %v2705 = vpack.c.b16 %v2459, %v2457
    %v2706 = vpack.c.b16 %v2460, %v2458
    %v2707 = vpack.c.b16 %v2463, %v2461
    %v2708 = vpack.c.b16 %v2464, %v2462
    %v2709 = vpack.c.b16 %v2467, %v2465
    %v2710 = vpack.c.b16 %v2468, %v2466
    %v2711 = vpack.c.b16 %v2471, %v2469
    %v2712 = vpack.c.b16 %v2472, %v2470
    %v2713 = vpack.c.b16 %v2475, %v2473
    %v2714 = vpack.c.b16 %v2476, %v2474
    %v2715 = vpack.c.b16 %v2479, %v2477
    %v2716 = vpack.c.b16 %v2480, %v2478
    %v2717 = vpack.c.b16 %v2483, %v2481
    %v2718 = vpack.c.b16 %v2484, %v2482
    %v2719 = vpack.c.b16 %v2487, %v2485
    %v2720 = vpack.c.b16 %v2488, %v2486
    %v2721 = vpack.c.b16 %v2491, %v2489
    %v2722 = vpack.c.b16 %v2492, %v2490
    %v2723 = vpack.c.b16 %v2495, %v2493
    %v2724 = vpack.c.b16 %v2496, %v2494
    %v2725 = vpack.c.b16 %v2499, %v2497
    %v2726 = vpack.c.b16 %v2500, %v2498
    %v2727 = vpack.c.b16 %v2503, %v2501
    %v2728 = vpack.c.b16 %v2504, %v2502
    %v2729 = vpack.c.b16 %v2507, %v2505
    %v2730 = vpack.c.b16 %v2508, %v2506
    %v2731 = vpack.c.b16 %v2511, %v2509
    %v2732 = vpack.c.b16 %v2512, %v2510
    %v2733 = vpack.c.b16 %v2515, %v2513
    %v2734 = vpack.c.b16 %v2516, %v2514
    %v2735 = vpack.c.b16 %v2519, %v2517
    %v2736 = vpack.c.b16 %v2520, %v2518
    %v2737 = vpack.c.b16 %v2523, %v2521
    %v2738 = vpack.c.b16 %v2524, %v2522
    %v2739 = vpack.c.b16 %v2527, %v2525
    %v2740 = vpack.c.b16 %v2528, %v2526
    %v2741 = vpack.c.b16 %v2531, %v2529
    %v2742 = vpack.c.b16 %v2532, %v2530
    %v2743 = vpack.c.b16 %v2535, %v2533
    %v2744 = vpack.c.b16 %v2536, %v2534
    %v2745 = vpack.c.b16 %v2539, %v2537
    %v2746 = vpack.c.b16 %v2540, %v2538
    %v2747 = vpack.c.b16 %v2543, %v2541
    %v2748 = vpack.c.b16 %v2544, %v2542
    %v2749 = vpack.c.b16 %v2547, %v2545
    %v2750 = vpack.c.b16 %v2548, %v2546
    %v2751 = vpack.c.b16 %v2551, %v2549
    %v2752 = vpack.c.b16 %v2552, %v2550
    %v2753 = vpack.c.b16 %v2555, %v2553
    %v2754 = vpack.c.b16 %v2556, %v2554
    %v2755 = vpack.c.b16 %v2559, %v2557
    %v2756 = vpack.c.b16 %v2560, %v2558
    %v2757 = vpack.c.b16 %v2563, %v2561
    %v2758 = vpack.c.b16 %v2564, %v2562
    %v2759 = vpack.c.b16 %v2567, %v2565
    %v2760 = vpack.c.b16 %v2568, %v2566
    %v2761 = vpack.c.b16 %v2571, %v2569
    %v2762 = vpack.c.b16 %v2572, %v2570
    %v2763 = vpack.c.b16 %v2575, %v2573
    %v2764 = vpack.c.b16 %v2576, %v2574
    %v2765 = vpack.c.b16 %v2579, %v2577
    %v2766 = vpack.c.b16 %v2580, %v2578
    %v2767 = vpack.c.b16 %v2583, %v2581
    %v2768 = vpack.c.b16 %v2584, %v2582
    %v2769 = vpack.c.b16 %v2587, %v2585
    %v2770 = vpack.c.b16 %v2588, %v2586
    %v2771 = vpack.c.b16 %v2591, %v2589
    %v2772 = vpack.c.b16 %v2592, %v2590
    %v2773 = vpack.c.b16 %v2595, %v2593
    %v2774 = vpack.c.b16 %v2596, %v2594
    %v2775 = vpack.c.b16 %v2599, %v2597
    %v2776 = vpack.c.b16 %v2600, %v2598
    %v2777 = vpack.c.b16 %v2603, %v2601
    %v2778 = vpack.c.b16 %v2604, %v2602
    %v2779 = vpack.c.b16 %v2607, %v2605
    %v2780 = vpack.c.b16 %v2608, %v2606
    %v2781 = vpack.c.b16 %v2611, %v2609
    %v2782 = vpack.c.b16 %v2612, %v2610
    %v2783 = vpack.c.b16 %v2615, %v2613
    %v2784 = vpack.c.b16 %v2616, %v2614
    %v2785 = vpack.c.b16 %v2619, %v2617
    %v2786 = vpack.c.b16 %v2620, %v2618
    %v2787 = vpack.c.b16 %v2623, %v2621
    %v2788 = vpack.c.b16 %v2624, %v2622
    %v2789 = vpack.c.b16 %v2627, %v2625
    %v2790 = vpack.c.b16 %v2628, %v2626
    %v2791 = vpack.c.b16 %v2631, %v2629
    %v2792 = vpack.c.b16 %v2632, %v2630
    %v2793 = vpack.c.b16 %v2635, %v2633
    %v2794 = vpack.c.b16 %v2636, %v2634
    %v2795 = vpack.c.b16 %v2639, %v2637
    %v2796 = vpack.c.b16 %v2640, %v2638
    %v2797 = vpack.c.b16 %v2643, %v2641
    %v2798 = vpack.c.b16 %v2644, %v2642
    %v2799 = vpack.c.b16 %v2647, %v2645
    %v2800 = vpack.c.b16 %v2648, %v2646
    %v2801 = vpack.c.b16 %v2651, %v2649
    %v2802 = vpack.c.b16 %v2652, %v2650
    %v2803 = vpack.c.b16 %v2655, %v2653
    %v2804 = vpack.c.b16 %v2656, %v2654
    %v2805 = vpack.c.b16 %v2659, %v2657
    %v2806 = vpack.c.b16 %v2660, %v2658
    %v2807 = vpack.c.b16 %v2663, %v2661
    %v2808 = vpack.c.b16 %v2664, %v2662
    %v2809 = vpack.c.b16 %v2667, %v2665
    %v2810 = vpack.c.b16 %v2668, %v2666
    %v2811 = vpack.c.b16 %v2671, %v2669
    %v2812 = vpack.c.b16 %v2672, %v2670
    %v2813 = vpack.c.b16 %v2675, %v2673
    %v2814 = vpack.c.b16 %v2676, %v2674
    %v2815 = vpack.c.b16 %v2679, %v2677
    %v2816 = vpack.c.b16 %v2680, %v2678
    %v2817 = vpack.c.b16 %v2683, %v2681
    %v2818 = vpack.c.b16 %v2684, %v2682
    %v2819 = vpack.c.b16 %v2687, %v2685
    %v2820 = vpack.c.b16 %v2688, %v2686
    %v2821 = vpack.c.b16 %v2691, %v2689
    %v2822 = vpack.c.b16 %v2692, %v2690
    %v2823 = vpack.c.b16 %v2695, %v2693
    %v2824 = vpack.c.b16 %v2696, %v2694
    %2953 = vmatpush.bf16.msra.mxu0 %v2711
    %2954 = vmatpush.bf16.msra.mxu0 %v2709
    %2955 = vmatpush.bf16.msra.mxu0 %v2707
    %2956 = vmatpush.bf16.msra.mxu0 %v2705
    %2957 = vmatpush.bf16.msra.mxu0 %v2703
    %2958 = vmatpush.bf16.msra.mxu0 %v2701
    %2959 = vmatpush.bf16.msra.mxu0 %v2699
    %2960 = vmatpush.bf16.msra.mxu0 %v2697
    %2961 = vmatmul.bf16.gmra.mxu0 %v2171
    %v2962 = vpop.f32.mrf.mxu0
    %v2963 = vadd.f32 %v2309, %v2962
    %v2964 = vpop.f32.mrf.mxu0
    %v2965 = vadd.f32 %v2309, %v2964
    %2966 = vdwg.mxu0
    %2967 = vmatpush.bf16.msra.mxu0 %v2727
    %2968 = vmatpush.bf16.msra.mxu0 %v2725
    %2969 = vmatpush.bf16.msra.mxu0 %v2723
    %2970 = vmatpush.bf16.msra.mxu0 %v2721
    %2971 = vmatpush.bf16.msra.mxu0 %v2719
    %2972 = vmatpush.bf16.msra.mxu0 %v2717
    %2973 = vmatpush.bf16.msra.mxu0 %v2715
    %2974 = vmatpush.bf16.msra.mxu0 %v2713
    %2975 = vmatmul.bf16.gmra.mxu0 %v2172
    %v2976 = vpop.f32.mrf.mxu0
    %v2977 = vadd.f32 %v2963, %v2976
    %v2978 = vpop.f32.mrf.mxu0
    %v2979 = vadd.f32 %v2965, %v2978
    %2980 = vdwg.mxu0
    %2981 = vmatpush.bf16.msra.mxu0 %v2743
    %2982 = vmatpush.bf16.msra.mxu0 %v2741
    %2983 = vmatpush.bf16.msra.mxu0 %v2739
    %2984 = vmatpush.bf16.msra.mxu0 %v2737
    %2985 = vmatpush.bf16.msra.mxu0 %v2735
    %2986 = vmatpush.bf16.msra.mxu0 %v2733
    %2987 = vmatpush.bf16.msra.mxu0 %v2731
    %2988 = vmatpush.bf16.msra.mxu0 %v2729
    %2989 = vmatmul.bf16.gmra.mxu0 %v2173
    %v2990 = vpop.f32.mrf.mxu0
    %v2991 = vadd.f32 %v2977, %v2990
    %v2992 = vpop.f32.mrf.mxu0
    %v2993 = vadd.f32 %v2979, %v2992
    %2994 = vdwg.mxu0
    %2995 = vmatpush.bf16.msra.mxu0 %v2759
    %2996 = vmatpush.bf16.msra.mxu0 %v2757
    %2997 = vmatpush.bf16.msra.mxu0 %v2755
    %2998 = vmatpush.bf16.msra.mxu0 %v2753
    %2999 = vmatpush.bf16.msra.mxu0 %v2751
    %3000 = vmatpush.bf16.msra.mxu0 %v2749
    %3001 = vmatpush.bf16.msra.mxu0 %v2747
    %3002 = vmatpush.bf16.msra.mxu0 %v2745
    %3003 = vmatmul.bf16.gmra.mxu0 %v2174
    %v3004 = vpop.f32.mrf.mxu0
    %v3005 = vadd.f32 %v2991, %v3004
    %v3006 = vpop.f32.mrf.mxu0
    %v3007 = vadd.f32 %v2993, %v3006
    %3008 = vdwg.mxu0
    %3009 = vmatpush.bf16.msra.mxu0 %v2775
    %3010 = vmatpush.bf16.msra.mxu0 %v2773
    %3011 = vmatpush.bf16.msra.mxu0 %v2771
    %3012 = vmatpush.bf16.msra.mxu0 %v2769
    %3013 = vmatpush.bf16.msra.mxu0 %v2767
    %3014 = vmatpush.bf16.msra.mxu0 %v2765
    %3015 = vmatpush.bf16.msra.mxu0 %v2763
    %3016 = vmatpush.bf16.msra.mxu0 %v2761
    %3017 = vmatmul.bf16.gmra.mxu0 %v2175
    %v3018 = vpop.f32.mrf.mxu0
    %v3019 = vadd.f32 %v3005, %v3018
    %v3020 = vpop.f32.mrf.mxu0
    %v3021 = vadd.f32 %v3007, %v3020
    %3022 = vdwg.mxu0
    %3023 = vmatpush.bf16.msra.mxu0 %v2791
    %3024 = vmatpush.bf16.msra.mxu0 %v2789
    %3025 = vmatpush.bf16.msra.mxu0 %v2787
    %3026 = vmatpush.bf16.msra.mxu0 %v2785
    %3027 = vmatpush.bf16.msra.mxu0 %v2783
    %3028 = vmatpush.bf16.msra.mxu0 %v2781
    %3029 = vmatpush.bf16.msra.mxu0 %v2779
    %3030 = vmatpush.bf16.msra.mxu0 %v2777
    %3031 = vmatmul.bf16.gmra.mxu0 %v2176
    %v3032 = vpop.f32.mrf.mxu0
    %v3033 = vadd.f32 %v3019, %v3032
    %v3034 = vpop.f32.mrf.mxu0
    %v3035 = vadd.f32 %v3021, %v3034
    %3036 = vdwg.mxu0
    %3037 = vmatpush.bf16.msra.mxu0 %v2807
    %3038 = vmatpush.bf16.msra.mxu0 %v2805
    %3039 = vmatpush.bf16.msra.mxu0 %v2803
    %3040 = vmatpush.bf16.msra.mxu0 %v2801
    %3041 = vmatpush.bf16.msra.mxu0 %v2799
    %3042 = vmatpush.bf16.msra.mxu0 %v2797
    %3043 = vmatpush.bf16.msra.mxu0 %v2795
    %3044 = vmatpush.bf16.msra.mxu0 %v2793
    %3045 = vmatmul.bf16.gmra.mxu0 %v2177
    %v3046 = vpop.f32.mrf.mxu0
    %v3047 = vadd.f32 %v3033, %v3046
    %v3048 = vpop.f32.mrf.mxu0
    %v3049 = vadd.f32 %v3035, %v3048
    %3050 = vdwg.mxu0
    %3051 = vmatpush.bf16.msra.mxu0 %v2823
    %3052 = vmatpush.bf16.msra.mxu0 %v2821
    %3053 = vmatpush.bf16.msra.mxu0 %v2819
    %3054 = vmatpush.bf16.msra.mxu0 %v2817
    %3055 = vmatpush.bf16.msra.mxu0 %v2815
    %3056 = vmatpush.bf16.msra.mxu0 %v2813
    %3057 = vmatpush.bf16.msra.mxu0 %v2811
    %3058 = vmatpush.bf16.msra.mxu0 %v2809
    %3059 = vmatmul.bf16.gmra.mxu0 %v2178
    %v3060 = vpop.f32.mrf.mxu0
    %v3061 = vadd.f32 %v3047, %v3060
    %v3062 = vpop.f32.mrf.mxu0
    %v3063 = vadd.f32 %v3049, %v3062
    %3064 = vdwg.mxu0
    %3065 = vmatpush.bf16.msra.mxu0 %v2712
    %3066 = vmatpush.bf16.msra.mxu0 %v2710
    %3067 = vmatpush.bf16.msra.mxu0 %v2708
    %3068 = vmatpush.bf16.msra.mxu0 %v2706
    %3069 = vmatpush.bf16.msra.mxu0 %v2704
    %3070 = vmatpush.bf16.msra.mxu0 %v2702
    %3071 = vmatpush.bf16.msra.mxu0 %v2700
    %3072 = vmatpush.bf16.msra.mxu0 %v2698
    %3073 = vmatmul.bf16.gmra.mxu0 %v2171
    %v3074 = vpop.f32.mrf.mxu0
    %v3075 = vadd.f32 %v2310, %v3074
    %v3076 = vpop.f32.mrf.mxu0
    %v3077 = vadd.f32 %v2310, %v3076
    %3078 = vdwg.mxu0
    %3079 = vmatpush.bf16.msra.mxu0 %v2728
    %3080 = vmatpush.bf16.msra.mxu0 %v2726
    %3081 = vmatpush.bf16.msra.mxu0 %v2724
    %3082 = vmatpush.bf16.msra.mxu0 %v2722
    %3083 = vmatpush.bf16.msra.mxu0 %v2720
    %3084 = vmatpush.bf16.msra.mxu0 %v2718
    %3085 = vmatpush.bf16.msra.mxu0 %v2716
    %3086 = vmatpush.bf16.msra.mxu0 %v2714
    %3087 = vmatmul.bf16.gmra.mxu0 %v2172
    %v3088 = vpop.f32.mrf.mxu0
    %v3089 = vadd.f32 %v3075, %v3088
    %v3090 = vpop.f32.mrf.mxu0
    %v3091 = vadd.f32 %v3077, %v3090
    %3092 = vdwg.mxu0
    %3093 = vmatpush.bf16.msra.mxu0 %v2744
    %3094 = vmatpush.bf16.msra.mxu0 %v2742
    %3095 = vmatpush.bf16.msra.mxu0 %v2740
    %3096 = vmatpush.bf16.msra.mxu0 %v2738
    %3097 = vmatpush.bf16.msra.mxu0 %v2736
    %3098 = vmatpush.bf16.msra.mxu0 %v2734
    %3099 = vmatpush.bf16.msra.mxu0 %v2732
    %3100 = vmatpush.bf16.msra.mxu0 %v2730
    %3101 = vmatmul.bf16.gmra.mxu0 %v2173
    %v3102 = vpop.f32.mrf.mxu0
    %v3103 = vadd.f32 %v3089, %v3102
    %v3104 = vpop.f32.mrf.mxu0
    %v3105 = vadd.f32 %v3091, %v3104
    %3106 = vdwg.mxu0
    %3107 = vmatpush.bf16.msra.mxu0 %v2760
    %3108 = vmatpush.bf16.msra.mxu0 %v2758
    %3109 = vmatpush.bf16.msra.mxu0 %v2756
    %3110 = vmatpush.bf16.msra.mxu0 %v2754
    %3111 = vmatpush.bf16.msra.mxu0 %v2752
    %3112 = vmatpush.bf16.msra.mxu0 %v2750
    %3113 = vmatpush.bf16.msra.mxu0 %v2748
    %3114 = vmatpush.bf16.msra.mxu0 %v2746
    %3115 = vmatmul.bf16.gmra.mxu0 %v2174
    %v3116 = vpop.f32.mrf.mxu0
    %v3117 = vadd.f32 %v3103, %v3116
    %v3118 = vpop.f32.mrf.mxu0
    %v3119 = vadd.f32 %v3105, %v3118
    %3120 = vdwg.mxu0
    %3121 = vmatpush.bf16.msra.mxu0 %v2776
    %3122 = vmatpush.bf16.msra.mxu0 %v2774
    %3123 = vmatpush.bf16.msra.mxu0 %v2772
    %3124 = vmatpush.bf16.msra.mxu0 %v2770
    %3125 = vmatpush.bf16.msra.mxu0 %v2768
    %3126 = vmatpush.bf16.msra.mxu0 %v2766
    %3127 = vmatpush.bf16.msra.mxu0 %v2764
    %3128 = vmatpush.bf16.msra.mxu0 %v2762
    %3129 = vmatmul.bf16.gmra.mxu0 %v2175
    %v3130 = vpop.f32.mrf.mxu0
    %v3131 = vadd.f32 %v3117, %v3130
    %v3132 = vpop.f32.mrf.mxu0
    %v3133 = vadd.f32 %v3119, %v3132
    %3134 = vdwg.mxu0
    %3135 = vmatpush.bf16.msra.mxu0 %v2792
    %3136 = vmatpush.bf16.msra.mxu0 %v2790
    %3137 = vmatpush.bf16.msra.mxu0 %v2788
    %3138 = vmatpush.bf16.msra.mxu0 %v2786
    %3139 = vmatpush.bf16.msra.mxu0 %v2784
    %3140 = vmatpush.bf16.msra.mxu0 %v2782
    %3141 = vmatpush.bf16.msra.mxu0 %v2780
    %3142 = vmatpush.bf16.msra.mxu0 %v2778
    %3143 = vmatmul.bf16.gmra.mxu0 %v2176
    %v3144 = vpop.f32.mrf.mxu0
    %v3145 = vadd.f32 %v3131, %v3144
    %v3146 = vpop.f32.mrf.mxu0
    %v3147 = vadd.f32 %v3133, %v3146
    %3148 = vdwg.mxu0
    %3149 = vmatpush.bf16.msra.mxu0 %v2808
    %3150 = vmatpush.bf16.msra.mxu0 %v2806
    %3151 = vmatpush.bf16.msra.mxu0 %v2804
    %3152 = vmatpush.bf16.msra.mxu0 %v2802
    %3153 = vmatpush.bf16.msra.mxu0 %v2800
    %3154 = vmatpush.bf16.msra.mxu0 %v2798
    %3155 = vmatpush.bf16.msra.mxu0 %v2796
    %3156 = vmatpush.bf16.msra.mxu0 %v2794
    %3157 = vmatmul.bf16.gmra.mxu0 %v2177
    %v3158 = vpop.f32.mrf.mxu0
    %v3159 = vadd.f32 %v3145, %v3158
    %v3160 = vpop.f32.mrf.mxu0
    %v3161 = vadd.f32 %v3147, %v3160
    %3162 = vdwg.mxu0
    %3163 = vmatpush.bf16.msra.mxu0 %v2824
    %3164 = vmatpush.bf16.msra.mxu0 %v2822
    %3165 = vmatpush.bf16.msra.mxu0 %v2820
    %3166 = vmatpush.bf16.msra.mxu0 %v2818
    %3167 = vmatpush.bf16.msra.mxu0 %v2816
    %3168 = vmatpush.bf16.msra.mxu0 %v2814
    %3169 = vmatpush.bf16.msra.mxu0 %v2812
    %3170 = vmatpush.bf16.msra.mxu0 %v2810
    %3171 = vmatmul.bf16.gmra.mxu0 %v2178
    %v3172 = vpop.f32.mrf.mxu0
    %v3173 = vadd.f32 %v3159, %v3172
    %v3174 = vpop.f32.mrf.mxu0
    %v3175 = vadd.f32 %v3161, %v3174
    %3176 = vdwg.mxu0
    %v3177 = vmul.f32 %v3061, 0.2
    %v3178 = vmul.f32 %v3173, 0.2
    %v3179 = vmul.f32 %v3063, 0.2
    %v3180 = vmul.f32 %v3175, 0.2
    %v3181 = vmax.f32 %v3061, %v3177
    %v3182 = vmax.f32 %v3173, %v3178
    %v3183 = vmax.f32 %v3063, %v3179
    %v3184 = vmax.f32 %v3175, %v3180
    %v3185 = vpack.c.bf16 %v3183, %v3181
    %v3186 = vpack.c.bf16 %v3184, %v3182
    %v3187 = vld [vmem:[#allocation10] sm:$0xff]
    %v3188 = vld [vmem:[#allocation10 + $0x8] sm:$0xff]
    %v3189 = vld [vmem:[#allocation10 + $0x10] sm:$0xff]
    %v3190 = vld [vmem:[#allocation10 + $0x18] sm:$0xff]
    %v3191 = vld [vmem:[#allocation10 + $0x20] sm:$0xff]
    %v3192 = vld [vmem:[#allocation10 + $0x28] sm:$0xff]
    %v3193 = vld [vmem:[#allocation10 + $0x30] sm:$0xff]
    %v3194 = vld [vmem:[#allocation10 + $0x38] sm:$0xff]
    %v3195 = vld [vmem:[#allocation10 + $0x40] sm:$0xff]
    %v3196 = vld [vmem:[#allocation10 + $0x48] sm:$0xff]
    %v3197 = vld [vmem:[#allocation10 + $0x50] sm:$0xff]
    %v3198 = vld [vmem:[#allocation10 + $0x58] sm:$0xff]
    %v3199 = vld [vmem:[#allocation10 + $0x60] sm:$0xff]
    %v3200 = vld [vmem:[#allocation10 + $0x68] sm:$0xff]
    %v3201 = vld [vmem:[#allocation10 + $0x70] sm:$0xff]
    %v3202 = vld [vmem:[#allocation10 + $0x78] sm:$0xff]
    %v3203 = vld [vmem:[#allocation10 + $0x80] sm:$0xff]
    %v3204 = vld [vmem:[#allocation10 + $0x88] sm:$0xff]
    %v3205 = vld [vmem:[#allocation10 + $0x90] sm:$0xff]
    %v3206 = vld [vmem:[#allocation10 + $0x98] sm:$0xff]
    %v3207 = vld [vmem:[#allocation10 + $0xa0] sm:$0xff]
    %v3208 = vld [vmem:[#allocation10 + $0xa8] sm:$0xff]
    %v3209 = vld [vmem:[#allocation10 + $0xb0] sm:$0xff]
    %v3210 = vld [vmem:[#allocation10 + $0xb8] sm:$0xff]
    %v3211 = vld [vmem:[#allocation10 + $0xc0] sm:$0xff]
    %v3212 = vld [vmem:[#allocation10 + $0xc8] sm:$0xff]
    %v3213 = vld [vmem:[#allocation10 + $0xd0] sm:$0xff]
    %v3214 = vld [vmem:[#allocation10 + $0xd8] sm:$0xff]
    %v3215 = vld [vmem:[#allocation10 + $0xe0] sm:$0xff]
    %v3216 = vld [vmem:[#allocation10 + $0xe8] sm:$0xff]
    %v3217 = vld [vmem:[#allocation10 + $0xf0] sm:$0xff]
    %v3218 = vld [vmem:[#allocation10 + $0xf8] sm:$0xff]
    %v3219 = vld [vmem:[%s6] sm:$0x3]
    %v3221 = vperm.slane %v3219, 0
    %v3222 = vperm.slane %v3219, 1
    %v3257 = vunpack.c.l.b16 %v3187
    %v3258 = vunpack.c.h.b16 %v3187
    %v3259 = vunpack.c.l.b16 %v3188
    %v3260 = vunpack.c.h.b16 %v3188
    %v3261 = vunpack.c.l.b16 %v3189
    %v3262 = vunpack.c.h.b16 %v3189
    %v3263 = vunpack.c.l.b16 %v3190
    %v3264 = vunpack.c.h.b16 %v3190
    %v3265 = vunpack.c.l.b16 %v3191
    %v3266 = vunpack.c.h.b16 %v3191
    %v3267 = vunpack.c.l.b16 %v3192
    %v3268 = vunpack.c.h.b16 %v3192
    %v3269 = vunpack.c.l.b16 %v3193
    %v3270 = vunpack.c.h.b16 %v3193
    %v3271 = vunpack.c.l.b16 %v3194
    %v3272 = vunpack.c.h.b16 %v3194
    %v3273 = vunpack.c.l.b16 %v3195
    %v3274 = vunpack.c.h.b16 %v3195
    %v3275 = vunpack.c.l.b16 %v3196
    %v3276 = vunpack.c.h.b16 %v3196
    %v3277 = vunpack.c.l.b16 %v3197
    %v3278 = vunpack.c.h.b16 %v3197
    %v3279 = vunpack.c.l.b16 %v3198
    %v3280 = vunpack.c.h.b16 %v3198
    %v3281 = vunpack.c.l.b16 %v3199
    %v3282 = vunpack.c.h.b16 %v3199
    %v3283 = vunpack.c.l.b16 %v3200
    %v3284 = vunpack.c.h.b16 %v3200
    %v3285 = vunpack.c.l.b16 %v3201
    %v3286 = vunpack.c.h.b16 %v3201
    %v3287 = vunpack.c.l.b16 %v3202
    %v3288 = vunpack.c.h.b16 %v3202
    %v3289 = vunpack.c.l.b16 %v3203
    %v3290 = vunpack.c.h.b16 %v3203
    %v3291 = vunpack.c.l.b16 %v3204
    %v3292 = vunpack.c.h.b16 %v3204
    %v3293 = vunpack.c.l.b16 %v3205
    %v3294 = vunpack.c.h.b16 %v3205
    %v3295 = vunpack.c.l.b16 %v3206
    %v3296 = vunpack.c.h.b16 %v3206
    %v3297 = vunpack.c.l.b16 %v3207
    %v3298 = vunpack.c.h.b16 %v3207
    %v3299 = vunpack.c.l.b16 %v3208
    %v3300 = vunpack.c.h.b16 %v3208
    %v3301 = vunpack.c.l.b16 %v3209
    %v3302 = vunpack.c.h.b16 %v3209
    %v3303 = vunpack.c.l.b16 %v3210
    %v3304 = vunpack.c.h.b16 %v3210
    %v3305 = vunpack.c.l.b16 %v3211
    %v3306 = vunpack.c.h.b16 %v3211
    %v3307 = vunpack.c.l.b16 %v3212
    %v3308 = vunpack.c.h.b16 %v3212
    %v3309 = vunpack.c.l.b16 %v3213
    %v3310 = vunpack.c.h.b16 %v3213
    %v3311 = vunpack.c.l.b16 %v3214
    %v3312 = vunpack.c.h.b16 %v3214
    %v3313 = vunpack.c.l.b16 %v3215
    %v3314 = vunpack.c.h.b16 %v3215
    %v3315 = vunpack.c.l.b16 %v3216
    %v3316 = vunpack.c.h.b16 %v3216
    %v3317 = vunpack.c.l.b16 %v3217
    %v3318 = vunpack.c.h.b16 %v3217
    %v3319 = vunpack.c.l.b16 %v3218
    %v3320 = vunpack.c.h.b16 %v3218
    %v3321 = vpack.c.b16 %v3259, %v3257
    %v3322 = vpack.c.b16 %v3260, %v3258
    %v3323 = vpack.c.b16 %v3263, %v3261
    %v3324 = vpack.c.b16 %v3264, %v3262
    %v3325 = vpack.c.b16 %v3267, %v3265
    %v3326 = vpack.c.b16 %v3268, %v3266
    %v3327 = vpack.c.b16 %v3271, %v3269
    %v3328 = vpack.c.b16 %v3272, %v3270
    %v3329 = vpack.c.b16 %v3275, %v3273
    %v3330 = vpack.c.b16 %v3276, %v3274
    %v3331 = vpack.c.b16 %v3279, %v3277
    %v3332 = vpack.c.b16 %v3280, %v3278
    %v3333 = vpack.c.b16 %v3283, %v3281
    %v3334 = vpack.c.b16 %v3284, %v3282
    %v3335 = vpack.c.b16 %v3287, %v3285
    %v3336 = vpack.c.b16 %v3288, %v3286
    %v3337 = vpack.c.b16 %v3291, %v3289
    %v3338 = vpack.c.b16 %v3292, %v3290
    %v3339 = vpack.c.b16 %v3295, %v3293
    %v3340 = vpack.c.b16 %v3296, %v3294
    %v3341 = vpack.c.b16 %v3299, %v3297
    %v3342 = vpack.c.b16 %v3300, %v3298
    %v3343 = vpack.c.b16 %v3303, %v3301
    %v3344 = vpack.c.b16 %v3304, %v3302
    %v3345 = vpack.c.b16 %v3307, %v3305
    %v3346 = vpack.c.b16 %v3308, %v3306
    %v3347 = vpack.c.b16 %v3311, %v3309
    %v3348 = vpack.c.b16 %v3312, %v3310
    %v3349 = vpack.c.b16 %v3315, %v3313
    %v3350 = vpack.c.b16 %v3316, %v3314
    %v3351 = vpack.c.b16 %v3319, %v3317
    %v3352 = vpack.c.b16 %v3320, %v3318
    %3385 = vmatpush.bf16.msra.mxu0 %v3335
    %3386 = vmatpush.bf16.msra.mxu0 %v3333
    %3387 = vmatpush.bf16.msra.mxu0 %v3331
    %3388 = vmatpush.bf16.msra.mxu0 %v3329
    %3389 = vmatpush.bf16.msra.mxu0 %v3327
    %3390 = vmatpush.bf16.msra.mxu0 %v3325
    %3391 = vmatpush.bf16.msra.mxu0 %v3323
    %3392 = vmatpush.bf16.msra.mxu0 %v3321
    %3393 = vmatmul.bf16.gmra.mxu0 %v3185
    %v3394 = vpop.f32.mrf.mxu0
    %v3395 = vadd.f32 %v3221, %v3394
    %v3396 = vpop.f32.mrf.mxu0
    %v3397 = vadd.f32 %v3221, %v3396
    %3398 = vdwg.mxu0
    %3399 = vmatpush.bf16.msra.mxu0 %v3351
    %3400 = vmatpush.bf16.msra.mxu0 %v3349
    %3401 = vmatpush.bf16.msra.mxu0 %v3347
    %3402 = vmatpush.bf16.msra.mxu0 %v3345
    %3403 = vmatpush.bf16.msra.mxu0 %v3343
    %3404 = vmatpush.bf16.msra.mxu0 %v3341
    %3405 = vmatpush.bf16.msra.mxu0 %v3339
    %3406 = vmatpush.bf16.msra.mxu0 %v3337
    %3407 = vmatmul.bf16.gmra.mxu0 %v3186
    %v3408 = vpop.f32.mrf.mxu0
    %v3409 = vadd.f32 %v3395, %v3408
    %v3410 = vpop.f32.mrf.mxu0
    %v3411 = vadd.f32 %v3397, %v3410
    %3412 = vdwg.mxu0
    %3413 = vmatpush.bf16.msra.mxu0 %v3336
    %3414 = vmatpush.bf16.msra.mxu0 %v3334
    %3415 = vmatpush.bf16.msra.mxu0 %v3332
    %3416 = vmatpush.bf16.msra.mxu0 %v3330
    %3417 = vmatpush.bf16.msra.mxu0 %v3328
    %3418 = vmatpush.bf16.msra.mxu0 %v3326
    %3419 = vmatpush.bf16.msra.mxu0 %v3324
    %3420 = vmatpush.bf16.msra.mxu0 %v3322
    %3421 = vmatmul.bf16.gmra.mxu0 %v3185
    %v3422 = vpop.f32.mrf.mxu0
    %v3423 = vadd.f32 %v3222, %v3422
    %v3424 = vpop.f32.mrf.mxu0
    %v3425 = vadd.f32 %v3222, %v3424
    %3426 = vdwg.mxu0
    %3427 = vmatpush.bf16.msra.mxu0 %v3352
    %3428 = vmatpush.bf16.msra.mxu0 %v3350
    %3429 = vmatpush.bf16.msra.mxu0 %v3348
    %3430 = vmatpush.bf16.msra.mxu0 %v3346
    %3431 = vmatpush.bf16.msra.mxu0 %v3344
    %3432 = vmatpush.bf16.msra.mxu0 %v3342
    %3433 = vmatpush.bf16.msra.mxu0 %v3340
    %3434 = vmatpush.bf16.msra.mxu0 %v3338
    %3435 = vmatmul.bf16.gmra.mxu0 %v3186
    %v3436 = vpop.f32.mrf.mxu0
    %v3437 = vadd.f32 %v3423, %v3436
    %v3438 = vpop.f32.mrf.mxu0
    %v3439 = vadd.f32 %v3425, %v3438
    %3440 = vdwg.mxu0
    %v3441 = vmul.f32 %v3409, 0.2
    %v3442 = vmul.f32 %v3437, 0.2
    %v3443 = vmul.f32 %v3411, 0.2
    %v3444 = vmul.f32 %v3439, 0.2
    %v3445 = vmax.f32 %v3409, %v3441
    %v3446 = vmax.f32 %v3437, %v3442
    %v3447 = vmax.f32 %v3411, %v3443
    %v3448 = vmax.f32 %v3439, %v3444
    %v3449 = vpack.c.bf16 %v3447, %v3445
    %v3450 = vpack.c.bf16 %v3448, %v3446
    %v3451 = vld [vmem:[#allocation11] sm:$0xf]
    %v3452 = vld [vmem:[#allocation11 + $0x4] sm:$0xf]
    %v3453 = vld [vmem:[#allocation11 + $0x8] sm:$0xf]
    %v3454 = vld [vmem:[#allocation11 + $0xc] sm:$0xf]
    %v3455 = vld [vmem:[#allocation11 + $0x10] sm:$0xf]
    %v3456 = vld [vmem:[#allocation11 + $0x14] sm:$0xf]
    %v3457 = vld [vmem:[#allocation11 + $0x18] sm:$0xf]
    %v3458 = vld [vmem:[#allocation11 + $0x1c] sm:$0xf]
    %v3459 = vld [vmem:[#allocation11 + $0x20] sm:$0xf]
    %v3460 = vld [vmem:[#allocation11 + $0x24] sm:$0xf]
    %v3461 = vld [vmem:[#allocation11 + $0x28] sm:$0xf]
    %v3462 = vld [vmem:[#allocation11 + $0x2c] sm:$0xf]
    %v3463 = vld [vmem:[#allocation11 + $0x30] sm:$0xf]
    %v3464 = vld [vmem:[#allocation11 + $0x34] sm:$0xf]
    %v3465 = vld [vmem:[#allocation11 + $0x38] sm:$0xf]
    %v3466 = vld [vmem:[#allocation11 + $0x3c] sm:$0xf]
    %v3467 = vld [vmem:[#allocation11 + $0x40] sm:$0xf]
    %v3468 = vld [vmem:[#allocation11 + $0x44] sm:$0xf]
    %v3469 = vld [vmem:[#allocation11 + $0x48] sm:$0xf]
    %v3470 = vld [vmem:[#allocation11 + $0x4c] sm:$0xf]
    %v3471 = vld [vmem:[#allocation11 + $0x50] sm:$0xf]
    %v3472 = vld [vmem:[#allocation11 + $0x54] sm:$0xf]
    %v3473 = vld [vmem:[#allocation11 + $0x58] sm:$0xf]
    %v3474 = vld [vmem:[#allocation11 + $0x5c] sm:$0xf]
    %v3475 = vld [vmem:[#allocation11 + $0x60] sm:$0xf]
    %v3476 = vld [vmem:[#allocation11 + $0x64] sm:$0xf]
    %v3477 = vld [vmem:[#allocation11 + $0x68] sm:$0xf]
    %v3478 = vld [vmem:[#allocation11 + $0x6c] sm:$0xf]
    %v3479 = vld [vmem:[#allocation11 + $0x70] sm:$0xf]
    %v3480 = vld [vmem:[#allocation11 + $0x74] sm:$0xf]
    %v3481 = vld [vmem:[#allocation11 + $0x78] sm:$0xf]
    %v3482 = vld [vmem:[#allocation11 + $0x7c] sm:$0xf]
    %v3483 = vld [vmem:[%s8] sm:$0x1]
    %v3485 = vperm.slane %v3483, 0
    %v3519 = vunpack.c.l.b16 %v3451
    %v3520 = vunpack.c.l.b16 %v3452
    %v3521 = vunpack.c.l.b16 %v3453
    %v3522 = vunpack.c.l.b16 %v3454
    %v3523 = vunpack.c.l.b16 %v3455
    %v3524 = vunpack.c.l.b16 %v3456
    %v3525 = vunpack.c.l.b16 %v3457
    %v3526 = vunpack.c.l.b16 %v3458
    %v3527 = vunpack.c.l.b16 %v3459
    %v3528 = vunpack.c.l.b16 %v3460
    %v3529 = vunpack.c.l.b16 %v3461
    %v3530 = vunpack.c.l.b16 %v3462
    %v3531 = vunpack.c.l.b16 %v3463
    %v3532 = vunpack.c.l.b16 %v3464
    %v3533 = vunpack.c.l.b16 %v3465
    %v3534 = vunpack.c.l.b16 %v3466
    %v3535 = vunpack.c.l.b16 %v3467
    %v3536 = vunpack.c.l.b16 %v3468
    %v3537 = vunpack.c.l.b16 %v3469
    %v3538 = vunpack.c.l.b16 %v3470
    %v3539 = vunpack.c.l.b16 %v3471
    %v3540 = vunpack.c.l.b16 %v3472
    %v3541 = vunpack.c.l.b16 %v3473
    %v3542 = vunpack.c.l.b16 %v3474
    %v3543 = vunpack.c.l.b16 %v3475
    %v3544 = vunpack.c.l.b16 %v3476
    %v3545 = vunpack.c.l.b16 %v3477
    %v3546 = vunpack.c.l.b16 %v3478
    %v3547 = vunpack.c.l.b16 %v3479
    %v3548 = vunpack.c.l.b16 %v3480
    %v3549 = vunpack.c.l.b16 %v3481
    %v3550 = vunpack.c.l.b16 %v3482
    %v3551 = vpack.c.b16 %v3520, %v3519
    %v3552 = vpack.c.b16 %v3522, %v3521
    %v3553 = vpack.c.b16 %v3524, %v3523
    %v3554 = vpack.c.b16 %v3526, %v3525
    %v3555 = vpack.c.b16 %v3528, %v3527
    %v3556 = vpack.c.b16 %v3530, %v3529
    %v3557 = vpack.c.b16 %v3532, %v3531
    %v3558 = vpack.c.b16 %v3534, %v3533
    %v3559 = vpack.c.b16 %v3536, %v3535
    %v3560 = vpack.c.b16 %v3538, %v3537
    %v3561 = vpack.c.b16 %v3540, %v3539
    %v3562 = vpack.c.b16 %v3542, %v3541
    %v3563 = vpack.c.b16 %v3544, %v3543
    %v3564 = vpack.c.b16 %v3546, %v3545
    %v3565 = vpack.c.b16 %v3548, %v3547
    %v3566 = vpack.c.b16 %v3550, %v3549
    %3583 = vmatpush.bf16.msra.mxu0 %v3558
    %3584 = vmatpush.bf16.msra.mxu0 %v3557
    %3585 = vmatpush.bf16.msra.mxu0 %v3556
    %3586 = vmatpush.bf16.msra.mxu0 %v3555
    %3587 = vmatpush.bf16.msra.mxu0 %v3554
    %3588 = vmatpush.bf16.msra.mxu0 %v3553
    %3589 = vmatpush.bf16.msra.mxu0 %v3552
    %3590 = vmatpush.bf16.msra.mxu0 %v3551
    %3591 = vmatmul.bf16.gmra.mxu0 %v3449
    %v3592 = vpop.f32.mrf.mxu0
    %v3593 = vadd.f32 %v3485, %v3592
    %v3594 = vpop.f32.mrf.mxu0
    %v3595 = vadd.f32 %v3485, %v3594
    %3596 = vdwg.mxu0
    %3597 = vmatpush.bf16.msra.mxu0 %v3566
    %3598 = vmatpush.bf16.msra.mxu0 %v3565
    %3599 = vmatpush.bf16.msra.mxu0 %v3564
    %3600 = vmatpush.bf16.msra.mxu0 %v3563
    %3601 = vmatpush.bf16.msra.mxu0 %v3562
    %3602 = vmatpush.bf16.msra.mxu0 %v3561
    %3603 = vmatpush.bf16.msra.mxu0 %v3560
    %3604 = vmatpush.bf16.msra.mxu0 %v3559
    %3605 = vmatmul.bf16.gmra.mxu0 %v3450
    %v3606 = vpop.f32.mrf.mxu0
    %v3607 = vadd.f32 %v3593, %v3606
    %v3608 = vpop.f32.mrf.mxu0
    %v3609 = vadd.f32 %v3595, %v3608
    %3610 = vdwg.mxu0
    %3611 = vst [vmem:[#allocation13] sm:$0xff] %v3607
    %3612 = vst [vmem:[#allocation13 + $0x8] sm:$0xff] %v3609
    // Predicated region
    $region62: #{tpu_custom_call.1} parent=1 // pred_check
      _
    $region63: #{tpu_custom_call.1} parent=1 // pred_check_branch
      %3614 = sbr.rel (0) target = $region65
    $region64: #{tpu_custom_call.1} parent=1 // pred_region
      %3616 = vsyncadd [#allocation4], 0
      %s3617 = sshll.u32 [#allocation13], 4
      %s3618 = int_to_ptr.vmem [resolvable:$true] %s3617
      %s3619 = sshll.u32 %s9, 4
      %s3620 = int_to_ptr.hbm [resolvable:$true] %s3619
      %3625 = dma.vmem_to_hbm [thread:$0]  %s3618, 256, %s3620, [#allocation4], 128, 128, 8
    $region65: #{tpu_custom_call.1} parent=1 // pred_fallthru
      _
    // Predicated region
    $region66: #{tpu_custom_call.1} parent=1 // pred_check
      _
    $region67: #{tpu_custom_call.1} parent=1 // pred_check_branch
      %3627 = sbr.rel (0) target = $region69
    $region68: #{tpu_custom_call.1} parent=1 // pred_region
      %3629 = dma.done [#allocation4], 256
    $region69: #{tpu_custom_call.1} parent=1 // pred_fallthru
      _
    %3630 = vsyncpa [#allocation3], 1
    %3631 = vsyncpa [#allocation6], 1
    %3632 = vsyncpa [#allocation9], 1
    %3633 = vsyncpa [#allocation12], 1
    %3634 = vsyncpa [#allocation4], 1

</llo_original>
